<compile_context>
chip_gen: v6e
topology: v6e:2x2x1
jax: 0.10.0
libtpu: 0.0.40
codegen_flags: <defaults>
</compile_context>

<pallas_src>
import functools

import jax
import jax.numpy as jnp
from jax.experimental import pallas as pl
from jax.experimental.pallas import tpu as pltpu


def _round_up(x, m):
    return (x + m - 1) // m * m


def _num_tensorcores():
    # Best-effort TensorCore count (v7x has 2 per chip).  Defaults to 2 so
    # the grid is split / even-sized whenever it could matter.
    try:
        info = pltpu.get_tpu_info()
        for attr in ("num_cores", "core_count", "num_tensorcores",
                     "tensorcore_count"):
            val = getattr(info, attr, None)
            if isinstance(val, int) and val > 0:
                return val
    except Exception:
        pass
    return 2


def _pooling_char_embed_kernel(chars_ref, thi_ref, tlo_ref, out_ref,
                               *, p, c, vpad):
    # chars_ref: (G, p*C) int32  -- each row holds the C char ids of p
    #                               consecutive words (word-major).
    # thi_ref:   (p*Vpad, p*D) bf16 -- block-diagonal table, high bf16 half.
    # tlo_ref:   (p*Vpad, p*D) bf16 -- block-diagonal table, low residual.
    # out_ref:   (G, p*D) f32   -- p word embeddings packed per row
    #                              (row-major view of the (G*p, D) output).
    chars = chars_ref[...]                                    # (G, p*C)
    thi = thi_ref[...]                                        # (p*Vpad, p*D)
    tlo = tlo_ref[...]
    lane = jax.lax.broadcasted_iota(jnp.int32, (1, vpad), 1)  # (1, Vpad)

    def gather(k):
        # Lane-dense one-hot for char position k of all p packed word slots.
        # Column j*C + k of `chars` is char k of the j-th packed word.
        slabs = [
            (chars[:, j * c + k:j * c + k + 1] == lane).astype(jnp.bfloat16)
            for j in range(p)
        ]
        oh = slabs[0] if p == 1 else jnp.concatenate(slabs, axis=-1)
        # (G, p*Vpad) @ (p*Vpad, p*D): one lane-dense MXU gather for p words.
        return (jnp.dot(oh, thi, preferred_element_type=jnp.float32)
                + jnp.dot(oh, tlo, preferred_element_type=jnp.float32))

    acc = gather(0)                              # (G, p*D) f32
    for k in range(1, c):                        # running max, no big slabs
        acc = jnp.maximum(acc, gather(k))
    out_ref[...] = acc


def pooling_char_embeddor(chars, table, *, word_tile=1024):
    """chars: (B, W, C) int ids, table: (V, D) float -> (B, W, D) f32."""
    b, w, c = chars.shape
    v, d = table.shape
    n = b * w

    # Lane packing: p consecutive words share one 128-wide row so the output
    # stores and the block-diagonal matmul are fully lane-dense.
    p = 128 // d if (d < 128 and 128 % d == 0) else 1
    min_tile = 8 * p                       # keeps every block (8,128)-legal

    # Words per grid step: as big as word_tile allows, but split across the
    # TensorCores (even step count) when there is enough work.
    cores = _num_tensorcores()
    n_eff = max(n, 1)
    want = max(min_tile, _round_up(word_tile, min_tile))
    tile = min(want, _round_up(n_eff, min_tile))
    if cores > 1:
        per_core = _round_up(-(-n_eff // cores), min_tile)
        tile = max(min_tile, min(tile, per_core))
    steps = -(-n_eff // tile)
    if cores > 1 and steps > 1 and steps % cores:
        steps = _round_up(steps, cores)
    # Re-balance the tile to the chosen step count (minimizes padding).
    tile = max(min_tile, _round_up(-(-n_eff // steps), min_tile))
    n_pad = steps * tile

    # Pad words (extra rows use char id 0, sliced away at the end) and pack
    # p words per row.  Both reshapes are free row-major views.
    chars_flat = chars.reshape(n, c).astype(jnp.int32)
    if n_pad != n:
        chars_flat = jnp.pad(chars_flat, ((0, n_pad - n), (0, 0)))
    chars_packed = chars_flat.reshape(n_pad // p, p * c)

    # Table prep: pad vocab to a multiple of 128 (padded zero rows never
    # match an id), split f32 exactly into bf16 hi + bf16 residual lo, and
    # lay both out block-diagonally (word-slot j occupies rows
    # [j*Vpad,(j+1)*Vpad), cols [j*D,(j+1)*D)).
    vpad = _round_up(v, 128)
    tab = table.astype(jnp.float32)
    if vpad != v:
        tab = jnp.pad(tab, ((0, vpad - v), (0, 0)))
    hi = tab.astype(jnp.bfloat16)
    lo = (tab - hi.astype(jnp.float32)).astype(jnp.bfloat16)

    def block_diag(x):
        if p == 1:
            return x
        out = jnp.zeros((p * vpad, p * d), x.dtype)
        for j in range(p):
            out = out.at[j * vpad:(j + 1) * vpad, j * d:(j + 1) * d].set(x)
        return out

    thi_bd = block_diag(hi)
    tlo_bd = block_diag(lo)

    g_rows = tile // p                      # packed rows per grid step
    kernel = functools.partial(_pooling_char_embed_kernel, p=p, c=c, vpad=vpad)

    out_packed = pl.pallas_call(
        kernel,
        out_shape=jax.ShapeDtypeStruct((n_pad // p, p * d), jnp.float32),
        grid_spec=pltpu.PrefetchScalarGridSpec(
            num_scalar_prefetch=0,
            grid=(steps,),
            in_specs=[
                pl.BlockSpec((g_rows, p * c), lambda i: (i, 0)),
                # Constant index_maps: the table blocks are copied only once.
                pl.BlockSpec((p * vpad, p * d), lambda i: (0, 0)),
                pl.BlockSpec((p * vpad, p * d), lambda i: (0, 0)),
            ],
            out_specs=pl.BlockSpec((g_rows, p * d), lambda i: (i, 0)),
        ),
        compiler_params=pltpu.CompilerParams(
            dimension_semantics=("parallel",)),
    )(chars_packed, thi_bd, tlo_bd)

    # (n_pad//p, p*D) is a row-major view of (n_pad, D): undo with free views.
    return out_packed.reshape(n_pad, d)[:n].reshape(b, w, d)


def _reference(chars, table):
    # Pure-JAX reference of the PyTorch forward: embedding lookup + max over
    # chars.  The zero padding row participates in the max, like the module.
    emb = jnp.take(table.astype(jnp.float32), chars, axis=0)   # (B, W, C, D)
    return emb.max(axis=2)                                     # (B, W, D)


if __name__ == "__main__":
    key = jax.random.PRNGKey(0)
    k_chars, k_table, k_chars2, k_table2 = jax.random.split(key, 4)

    # --- Small shapes consistent with the module ---
    batch_size = 2
    max_num_words = 8
    max_num_chars = 8
    char_vocab_size = 26
    embedding_dim = 32
    vocab = char_vocab_size + 1                 # +1 for padding index 0

    # Deterministic "parameters": nn.Embedding weight, padding_idx=0 row zeroed.
    table = jax.random.normal(k_table, (vocab, embedding_dim), jnp.float32)
    table = table.at[0].set(0.0)

    # Char ids in [0, vocab); 0 acts as padding.  `words` is unused.
    chars = jax.random.randint(
        k_chars, (batch_size, max_num_words, max_num_chars), 0, vocab,
        dtype=jnp.int32)
    words = jnp.zeros((batch_size, max_num_words), jnp.int32)

    out = jax.block_until_ready(pooling_char_embeddor(chars, table))
    ref = _reference(chars, table)
    assert out.shape == (batch_size, max_num_words, embedding_dim)
    assert jnp.allclose(out, ref, atol=1e-5, rtol=1e-5)

    # --- Larger check: multi-step grid, vocab/word padding, lane packing ---
    b2, w2, c2, v2, d2 = 4, 300, 8, 50, 32
    table2 = jax.random.normal(k_table2, (v2 + 1, d2), jnp.float32)
    table2 = table2.at[0].set(0.0)
    chars2 = jax.random.randint(k_chars2, (b2, w2, c2), 0, v2 + 1,
                                dtype=jnp.int32)
    out2 = jax.block_until_ready(pooling_char_embeddor(chars2, table2))
    assert jnp.allclose(out2, _reference(chars2, table2), atol=1e-5, rtol=1e-5)

    print("KERNEL_OK")
</pallas_src>

<mosaic_0001>
module attributes {stable_mosaic.version = 11 : i64} {
  func.func @_pooling_char_embed_kernel(%arg0: i32, %arg1: memref<8x32xi32, #tpu.memory_space<vmem>>, %arg2: memref<512x128xbf16, #tpu.memory_space<vmem>>, %arg3: memref<512x128xbf16, #tpu.memory_space<vmem>>, %arg4: memref<8x128xf32, #tpu.memory_space<vmem>>) attributes {dimension_semantics = [#tpu.dimension_semantics<parallel>], iteration_bounds = array<i64: 1>, scalar_prefetch = 0 : i64, scratch_operands = 0 : i64, tpu.core_type = #tpu.core_type<tc>, window_params = [{transform_indices = @transform_0, window_bounds = array<i64: 8, 32>}, {pipeline_mode = #tpu.pipeline_mode<synchronous>, transform_indices = @transform_1, window_bounds = array<i64: 512, 128>}, {pipeline_mode = #tpu.pipeline_mode<synchronous>, transform_indices = @transform_2, window_bounds = array<i64: 512, 128>}, {transform_indices = @transform_3, window_bounds = array<i64: 8, 128>}]} {
    %c0 = arith.constant 0 : index
    %c0_0 = arith.constant 0 : index
    %0 = vector.load %arg1[%c0, %c0_0] : memref<8x32xi32, #tpu.memory_space<vmem>>, vector<8x32xi32>
    %c0_1 = arith.constant 0 : index
    %c0_2 = arith.constant 0 : index
    %1 = vector.load %arg2[%c0_1, %c0_2] : memref<512x128xbf16, #tpu.memory_space<vmem>>, vector<512x128xbf16>
    %c0_3 = arith.constant 0 : index
    %c0_4 = arith.constant 0 : index
    %2 = vector.load %arg3[%c0_3, %c0_4] : memref<512x128xbf16, #tpu.memory_space<vmem>>, vector<512x128xbf16>
    %3 = tpu.iota {dimensions = array<i32: 1>} : vector<1x128xi32>
    %4 = vector.extract_strided_slice %0 {offsets = [0, 0], sizes = [8, 1], strides = [1, 1]} : vector<8x32xi32> to vector<8x1xi32>
    %5 = vector.broadcast %4 : vector<8x1xi32> to vector<8x128xi32>
    %6 = vector.broadcast %3 : vector<1x128xi32> to vector<8x128xi32>
    %7 = arith.cmpi eq, %5, %6 : vector<8x128xi32>
    %8 = arith.extui %7 : vector<8x128xi1> to vector<8x128xi32>
    %9 = arith.sitofp %8 : vector<8x128xi32> to vector<8x128xf32>
    %10 = arith.truncf %9 : vector<8x128xf32> to vector<8x128xbf16>
    %11 = vector.extract_strided_slice %0 {offsets = [0, 8], sizes = [8, 1], strides = [1, 1]} : vector<8x32xi32> to vector<8x1xi32>
    %12 = vector.broadcast %11 : vector<8x1xi32> to vector<8x128xi32>
    %13 = vector.broadcast %3 : vector<1x128xi32> to vector<8x128xi32>
    %14 = arith.cmpi eq, %12, %13 : vector<8x128xi32>
    %15 = arith.extui %14 : vector<8x128xi1> to vector<8x128xi32>
    %16 = arith.sitofp %15 : vector<8x128xi32> to vector<8x128xf32>
    %17 = arith.truncf %16 : vector<8x128xf32> to vector<8x128xbf16>
    %18 = vector.extract_strided_slice %0 {offsets = [0, 16], sizes = [8, 1], strides = [1, 1]} : vector<8x32xi32> to vector<8x1xi32>
    %19 = vector.broadcast %18 : vector<8x1xi32> to vector<8x128xi32>
    %20 = vector.broadcast %3 : vector<1x128xi32> to vector<8x128xi32>
    %21 = arith.cmpi eq, %19, %20 : vector<8x128xi32>
    %22 = arith.extui %21 : vector<8x128xi1> to vector<8x128xi32>
    %23 = arith.sitofp %22 : vector<8x128xi32> to vector<8x128xf32>
    %24 = arith.truncf %23 : vector<8x128xf32> to vector<8x128xbf16>
    %25 = vector.extract_strided_slice %0 {offsets = [0, 24], sizes = [8, 1], strides = [1, 1]} : vector<8x32xi32> to vector<8x1xi32>
    %26 = vector.broadcast %25 : vector<8x1xi32> to vector<8x128xi32>
    %27 = vector.broadcast %3 : vector<1x128xi32> to vector<8x128xi32>
    %28 = arith.cmpi eq, %26, %27 : vector<8x128xi32>
    %29 = arith.extui %28 : vector<8x128xi1> to vector<8x128xi32>
    %30 = arith.sitofp %29 : vector<8x128xi32> to vector<8x128xf32>
    %31 = arith.truncf %30 : vector<8x128xf32> to vector<8x128xbf16>
    %32 = tpu.concatenate %10, %17, %24, %31 in 1 : vector<8x128xbf16>, vector<8x128xbf16>, vector<8x128xbf16>, vector<8x128xbf16> -> vector<8x512xbf16>
    %cst = arith.constant dense<0.000000e+00> : vector<8x128xf32>
    %33 = tpu.matmul %32, %1, %cst {dimension_numbers = #tpu.dot_dimension_numbers<[1], [0], [0], [1], [0, 0, 1, 1], [], []>} : vector<8x512xbf16>, vector<512x128xbf16>, vector<8x128xf32> -> vector<8x128xf32>
    %cst_5 = arith.constant dense<0.000000e+00> : vector<8x128xf32>
    %34 = tpu.matmul %32, %2, %cst_5 {dimension_numbers = #tpu.dot_dimension_numbers<[1], [0], [0], [1], [0, 0, 1, 1], [], []>} : vector<8x512xbf16>, vector<512x128xbf16>, vector<8x128xf32> -> vector<8x128xf32>
    %35 = arith.addf %33, %34 : vector<8x128xf32>
    %36 = vector.extract_strided_slice %0 {offsets = [0, 1], sizes = [8, 1], strides = [1, 1]} : vector<8x32xi32> to vector<8x1xi32>
    %37 = vector.broadcast %36 : vector<8x1xi32> to vector<8x128xi32>
    %38 = vector.broadcast %3 : vector<1x128xi32> to vector<8x128xi32>
    %39 = arith.cmpi eq, %37, %38 : vector<8x128xi32>
    %40 = arith.extui %39 : vector<8x128xi1> to vector<8x128xi32>
    %41 = arith.sitofp %40 : vector<8x128xi32> to vector<8x128xf32>
    %42 = arith.truncf %41 : vector<8x128xf32> to vector<8x128xbf16>
    %43 = vector.extract_strided_slice %0 {offsets = [0, 9], sizes = [8, 1], strides = [1, 1]} : vector<8x32xi32> to vector<8x1xi32>
    %44 = vector.broadcast %43 : vector<8x1xi32> to vector<8x128xi32>
    %45 = vector.broadcast %3 : vector<1x128xi32> to vector<8x128xi32>
    %46 = arith.cmpi eq, %44, %45 : vector<8x128xi32>
    %47 = arith.extui %46 : vector<8x128xi1> to vector<8x128xi32>
    %48 = arith.sitofp %47 : vector<8x128xi32> to vector<8x128xf32>
    %49 = arith.truncf %48 : vector<8x128xf32> to vector<8x128xbf16>
    %50 = vector.extract_strided_slice %0 {offsets = [0, 17], sizes = [8, 1], strides = [1, 1]} : vector<8x32xi32> to vector<8x1xi32>
    %51 = vector.broadcast %50 : vector<8x1xi32> to vector<8x128xi32>
    %52 = vector.broadcast %3 : vector<1x128xi32> to vector<8x128xi32>
    %53 = arith.cmpi eq, %51, %52 : vector<8x128xi32>
    %54 = arith.extui %53 : vector<8x128xi1> to vector<8x128xi32>
    %55 = arith.sitofp %54 : vector<8x128xi32> to vector<8x128xf32>
    %56 = arith.truncf %55 : vector<8x128xf32> to vector<8x128xbf16>
    %57 = vector.extract_strided_slice %0 {offsets = [0, 25], sizes = [8, 1], strides = [1, 1]} : vector<8x32xi32> to vector<8x1xi32>
    %58 = vector.broadcast %57 : vector<8x1xi32> to vector<8x128xi32>
    %59 = vector.broadcast %3 : vector<1x128xi32> to vector<8x128xi32>
    %60 = arith.cmpi eq, %58, %59 : vector<8x128xi32>
    %61 = arith.extui %60 : vector<8x128xi1> to vector<8x128xi32>
    %62 = arith.sitofp %61 : vector<8x128xi32> to vector<8x128xf32>
    %63 = arith.truncf %62 : vector<8x128xf32> to vector<8x128xbf16>
    %64 = tpu.concatenate %42, %49, %56, %63 in 1 : vector<8x128xbf16>, vector<8x128xbf16>, vector<8x128xbf16>, vector<8x128xbf16> -> vector<8x512xbf16>
    %cst_6 = arith.constant dense<0.000000e+00> : vector<8x128xf32>
    %65 = tpu.matmul %64, %1, %cst_6 {dimension_numbers = #tpu.dot_dimension_numbers<[1], [0], [0], [1], [0, 0, 1, 1], [], []>} : vector<8x512xbf16>, vector<512x128xbf16>, vector<8x128xf32> -> vector<8x128xf32>
    %cst_7 = arith.constant dense<0.000000e+00> : vector<8x128xf32>
    %66 = tpu.matmul %64, %2, %cst_7 {dimension_numbers = #tpu.dot_dimension_numbers<[1], [0], [0], [1], [0, 0, 1, 1], [], []>} : vector<8x512xbf16>, vector<512x128xbf16>, vector<8x128xf32> -> vector<8x128xf32>
    %67 = arith.addf %65, %66 : vector<8x128xf32>
    %68 = arith.maximumf %35, %67 : vector<8x128xf32>
    %69 = vector.extract_strided_slice %0 {offsets = [0, 2], sizes = [8, 1], strides = [1, 1]} : vector<8x32xi32> to vector<8x1xi32>
    %70 = vector.broadcast %69 : vector<8x1xi32> to vector<8x128xi32>
    %71 = vector.broadcast %3 : vector<1x128xi32> to vector<8x128xi32>
    %72 = arith.cmpi eq, %70, %71 : vector<8x128xi32>
    %73 = arith.extui %72 : vector<8x128xi1> to vector<8x128xi32>
    %74 = arith.sitofp %73 : vector<8x128xi32> to vector<8x128xf32>
    %75 = arith.truncf %74 : vector<8x128xf32> to vector<8x128xbf16>
    %76 = vector.extract_strided_slice %0 {offsets = [0, 10], sizes = [8, 1], strides = [1, 1]} : vector<8x32xi32> to vector<8x1xi32>
    %77 = vector.broadcast %76 : vector<8x1xi32> to vector<8x128xi32>
    %78 = vector.broadcast %3 : vector<1x128xi32> to vector<8x128xi32>
    %79 = arith.cmpi eq, %77, %78 : vector<8x128xi32>
    %80 = arith.extui %79 : vector<8x128xi1> to vector<8x128xi32>
    %81 = arith.sitofp %80 : vector<8x128xi32> to vector<8x128xf32>
    %82 = arith.truncf %81 : vector<8x128xf32> to vector<8x128xbf16>
    %83 = vector.extract_strided_slice %0 {offsets = [0, 18], sizes = [8, 1], strides = [1, 1]} : vector<8x32xi32> to vector<8x1xi32>
    %84 = vector.broadcast %83 : vector<8x1xi32> to vector<8x128xi32>
    %85 = vector.broadcast %3 : vector<1x128xi32> to vector<8x128xi32>
    %86 = arith.cmpi eq, %84, %85 : vector<8x128xi32>
    %87 = arith.extui %86 : vector<8x128xi1> to vector<8x128xi32>
    %88 = arith.sitofp %87 : vector<8x128xi32> to vector<8x128xf32>
    %89 = arith.truncf %88 : vector<8x128xf32> to vector<8x128xbf16>
    %90 = vector.extract_strided_slice %0 {offsets = [0, 26], sizes = [8, 1], strides = [1, 1]} : vector<8x32xi32> to vector<8x1xi32>
    %91 = vector.broadcast %90 : vector<8x1xi32> to vector<8x128xi32>
    %92 = vector.broadcast %3 : vector<1x128xi32> to vector<8x128xi32>
    %93 = arith.cmpi eq, %91, %92 : vector<8x128xi32>
    %94 = arith.extui %93 : vector<8x128xi1> to vector<8x128xi32>
    %95 = arith.sitofp %94 : vector<8x128xi32> to vector<8x128xf32>
    %96 = arith.truncf %95 : vector<8x128xf32> to vector<8x128xbf16>
    %97 = tpu.concatenate %75, %82, %89, %96 in 1 : vector<8x128xbf16>, vector<8x128xbf16>, vector<8x128xbf16>, vector<8x128xbf16> -> vector<8x512xbf16>
    %cst_8 = arith.constant dense<0.000000e+00> : vector<8x128xf32>
    %98 = tpu.matmul %97, %1, %cst_8 {dimension_numbers = #tpu.dot_dimension_numbers<[1], [0], [0], [1], [0, 0, 1, 1], [], []>} : vector<8x512xbf16>, vector<512x128xbf16>, vector<8x128xf32> -> vector<8x128xf32>
    %cst_9 = arith.constant dense<0.000000e+00> : vector<8x128xf32>
    %99 = tpu.matmul %97, %2, %cst_9 {dimension_numbers = #tpu.dot_dimension_numbers<[1], [0], [0], [1], [0, 0, 1, 1], [], []>} : vector<8x512xbf16>, vector<512x128xbf16>, vector<8x128xf32> -> vector<8x128xf32>
    %100 = arith.addf %98, %99 : vector<8x128xf32>
    %101 = arith.maximumf %68, %100 : vector<8x128xf32>
    %102 = vector.extract_strided_slice %0 {offsets = [0, 3], sizes = [8, 1], strides = [1, 1]} : vector<8x32xi32> to vector<8x1xi32>
    %103 = vector.broadcast %102 : vector<8x1xi32> to vector<8x128xi32>
    %104 = vector.broadcast %3 : vector<1x128xi32> to vector<8x128xi32>
    %105 = arith.cmpi eq, %103, %104 : vector<8x128xi32>
    %106 = arith.extui %105 : vector<8x128xi1> to vector<8x128xi32>
    %107 = arith.sitofp %106 : vector<8x128xi32> to vector<8x128xf32>
    %108 = arith.truncf %107 : vector<8x128xf32> to vector<8x128xbf16>
    %109 = vector.extract_strided_slice %0 {offsets = [0, 11], sizes = [8, 1], strides = [1, 1]} : vector<8x32xi32> to vector<8x1xi32>
    %110 = vector.broadcast %109 : vector<8x1xi32> to vector<8x128xi32>
    %111 = vector.broadcast %3 : vector<1x128xi32> to vector<8x128xi32>
    %112 = arith.cmpi eq, %110, %111 : vector<8x128xi32>
    %113 = arith.extui %112 : vector<8x128xi1> to vector<8x128xi32>
    %114 = arith.sitofp %113 : vector<8x128xi32> to vector<8x128xf32>
    %115 = arith.truncf %114 : vector<8x128xf32> to vector<8x128xbf16>
    %116 = vector.extract_strided_slice %0 {offsets = [0, 19], sizes = [8, 1], strides = [1, 1]} : vector<8x32xi32> to vector<8x1xi32>
    %117 = vector.broadcast %116 : vector<8x1xi32> to vector<8x128xi32>
    %118 = vector.broadcast %3 : vector<1x128xi32> to vector<8x128xi32>
    %119 = arith.cmpi eq, %117, %118 : vector<8x128xi32>
    %120 = arith.extui %119 : vector<8x128xi1> to vector<8x128xi32>
    %121 = arith.sitofp %120 : vector<8x128xi32> to vector<8x128xf32>
    %122 = arith.truncf %121 : vector<8x128xf32> to vector<8x128xbf16>
    %123 = vector.extract_strided_slice %0 {offsets = [0, 27], sizes = [8, 1], strides = [1, 1]} : vector<8x32xi32> to vector<8x1xi32>
    %124 = vector.broadcast %123 : vector<8x1xi32> to vector<8x128xi32>
    %125 = vector.broadcast %3 : vector<1x128xi32> to vector<8x128xi32>
    %126 = arith.cmpi eq, %124, %125 : vector<8x128xi32>
    %127 = arith.extui %126 : vector<8x128xi1> to vector<8x128xi32>
    %128 = arith.sitofp %127 : vector<8x128xi32> to vector<8x128xf32>
    %129 = arith.truncf %128 : vector<8x128xf32> to vector<8x128xbf16>
    %130 = tpu.concatenate %108, %115, %122, %129 in 1 : vector<8x128xbf16>, vector<8x128xbf16>, vector<8x128xbf16>, vector<8x128xbf16> -> vector<8x512xbf16>
    %cst_10 = arith.constant dense<0.000000e+00> : vector<8x128xf32>
    %131 = tpu.matmul %130, %1, %cst_10 {dimension_numbers = #tpu.dot_dimension_numbers<[1], [0], [0], [1], [0, 0, 1, 1], [], []>} : vector<8x512xbf16>, vector<512x128xbf16>, vector<8x128xf32> -> vector<8x128xf32>
    %cst_11 = arith.constant dense<0.000000e+00> : vector<8x128xf32>
    %132 = tpu.matmul %130, %2, %cst_11 {dimension_numbers = #tpu.dot_dimension_numbers<[1], [0], [0], [1], [0, 0, 1, 1], [], []>} : vector<8x512xbf16>, vector<512x128xbf16>, vector<8x128xf32> -> vector<8x128xf32>
    %133 = arith.addf %131, %132 : vector<8x128xf32>
    %134 = arith.maximumf %101, %133 : vector<8x128xf32>
    %135 = vector.extract_strided_slice %0 {offsets = [0, 4], sizes = [8, 1], strides = [1, 1]} : vector<8x32xi32> to vector<8x1xi32>
    %136 = vector.broadcast %135 : vector<8x1xi32> to vector<8x128xi32>
    %137 = vector.broadcast %3 : vector<1x128xi32> to vector<8x128xi32>
    %138 = arith.cmpi eq, %136, %137 : vector<8x128xi32>
    %139 = arith.extui %138 : vector<8x128xi1> to vector<8x128xi32>
    %140 = arith.sitofp %139 : vector<8x128xi32> to vector<8x128xf32>
    %141 = arith.truncf %140 : vector<8x128xf32> to vector<8x128xbf16>
    %142 = vector.extract_strided_slice %0 {offsets = [0, 12], sizes = [8, 1], strides = [1, 1]} : vector<8x32xi32> to vector<8x1xi32>
    %143 = vector.broadcast %142 : vector<8x1xi32> to vector<8x128xi32>
    %144 = vector.broadcast %3 : vector<1x128xi32> to vector<8x128xi32>
    %145 = arith.cmpi eq, %143, %144 : vector<8x128xi32>
    %146 = arith.extui %145 : vector<8x128xi1> to vector<8x128xi32>
    %147 = arith.sitofp %146 : vector<8x128xi32> to vector<8x128xf32>
    %148 = arith.truncf %147 : vector<8x128xf32> to vector<8x128xbf16>
    %149 = vector.extract_strided_slice %0 {offsets = [0, 20], sizes = [8, 1], strides = [1, 1]} : vector<8x32xi32> to vector<8x1xi32>
    %150 = vector.broadcast %149 : vector<8x1xi32> to vector<8x128xi32>
    %151 = vector.broadcast %3 : vector<1x128xi32> to vector<8x128xi32>
    %152 = arith.cmpi eq, %150, %151 : vector<8x128xi32>
    %153 = arith.extui %152 : vector<8x128xi1> to vector<8x128xi32>
    %154 = arith.sitofp %153 : vector<8x128xi32> to vector<8x128xf32>
    %155 = arith.truncf %154 : vector<8x128xf32> to vector<8x128xbf16>
    %156 = vector.extract_strided_slice %0 {offsets = [0, 28], sizes = [8, 1], strides = [1, 1]} : vector<8x32xi32> to vector<8x1xi32>
    %157 = vector.broadcast %156 : vector<8x1xi32> to vector<8x128xi32>
    %158 = vector.broadcast %3 : vector<1x128xi32> to vector<8x128xi32>
    %159 = arith.cmpi eq, %157, %158 : vector<8x128xi32>
    %160 = arith.extui %159 : vector<8x128xi1> to vector<8x128xi32>
    %161 = arith.sitofp %160 : vector<8x128xi32> to vector<8x128xf32>
    %162 = arith.truncf %161 : vector<8x128xf32> to vector<8x128xbf16>
    %163 = tpu.concatenate %141, %148, %155, %162 in 1 : vector<8x128xbf16>, vector<8x128xbf16>, vector<8x128xbf16>, vector<8x128xbf16> -> vector<8x512xbf16>
    %cst_12 = arith.constant dense<0.000000e+00> : vector<8x128xf32>
    %164 = tpu.matmul %163, %1, %cst_12 {dimension_numbers = #tpu.dot_dimension_numbers<[1], [0], [0], [1], [0, 0, 1, 1], [], []>} : vector<8x512xbf16>, vector<512x128xbf16>, vector<8x128xf32> -> vector<8x128xf32>
    %cst_13 = arith.constant dense<0.000000e+00> : vector<8x128xf32>
    %165 = tpu.matmul %163, %2, %cst_13 {dimension_numbers = #tpu.dot_dimension_numbers<[1], [0], [0], [1], [0, 0, 1, 1], [], []>} : vector<8x512xbf16>, vector<512x128xbf16>, vector<8x128xf32> -> vector<8x128xf32>
    %166 = arith.addf %164, %165 : vector<8x128xf32>
    %167 = arith.maximumf %134, %166 : vector<8x128xf32>
    %168 = vector.extract_strided_slice %0 {offsets = [0, 5], sizes = [8, 1], strides = [1, 1]} : vector<8x32xi32> to vector<8x1xi32>
    %169 = vector.broadcast %168 : vector<8x1xi32> to vector<8x128xi32>
    %170 = vector.broadcast %3 : vector<1x128xi32> to vector<8x128xi32>
    %171 = arith.cmpi eq, %169, %170 : vector<8x128xi32>
    %172 = arith.extui %171 : vector<8x128xi1> to vector<8x128xi32>
    %173 = arith.sitofp %172 : vector<8x128xi32> to vector<8x128xf32>
    %174 = arith.truncf %173 : vector<8x128xf32> to vector<8x128xbf16>
    %175 = vector.extract_strided_slice %0 {offsets = [0, 13], sizes = [8, 1], strides = [1, 1]} : vector<8x32xi32> to vector<8x1xi32>
    %176 = vector.broadcast %175 : vector<8x1xi32> to vector<8x128xi32>
    %177 = vector.broadcast %3 : vector<1x128xi32> to vector<8x128xi32>
    %178 = arith.cmpi eq, %176, %177 : vector<8x128xi32>
    %179 = arith.extui %178 : vector<8x128xi1> to vector<8x128xi32>
    %180 = arith.sitofp %179 : vector<8x128xi32> to vector<8x128xf32>
    %181 = arith.truncf %180 : vector<8x128xf32> to vector<8x128xbf16>
    %182 = vector.extract_strided_slice %0 {offsets = [0, 21], sizes = [8, 1], strides = [1, 1]} : vector<8x32xi32> to vector<8x1xi32>
    %183 = vector.broadcast %182 : vector<8x1xi32> to vector<8x128xi32>
    %184 = vector.broadcast %3 : vector<1x128xi32> to vector<8x128xi32>
    %185 = arith.cmpi eq, %183, %184 : vector<8x128xi32>
    %186 = arith.extui %185 : vector<8x128xi1> to vector<8x128xi32>
    %187 = arith.sitofp %186 : vector<8x128xi32> to vector<8x128xf32>
    %188 = arith.truncf %187 : vector<8x128xf32> to vector<8x128xbf16>
    %189 = vector.extract_strided_slice %0 {offsets = [0, 29], sizes = [8, 1], strides = [1, 1]} : vector<8x32xi32> to vector<8x1xi32>
    %190 = vector.broadcast %189 : vector<8x1xi32> to vector<8x128xi32>
    %191 = vector.broadcast %3 : vector<1x128xi32> to vector<8x128xi32>
    %192 = arith.cmpi eq, %190, %191 : vector<8x128xi32>
    %193 = arith.extui %192 : vector<8x128xi1> to vector<8x128xi32>
    %194 = arith.sitofp %193 : vector<8x128xi32> to vector<8x128xf32>
    %195 = arith.truncf %194 : vector<8x128xf32> to vector<8x128xbf16>
    %196 = tpu.concatenate %174, %181, %188, %195 in 1 : vector<8x128xbf16>, vector<8x128xbf16>, vector<8x128xbf16>, vector<8x128xbf16> -> vector<8x512xbf16>
    %cst_14 = arith.constant dense<0.000000e+00> : vector<8x128xf32>
    %197 = tpu.matmul %196, %1, %cst_14 {dimension_numbers = #tpu.dot_dimension_numbers<[1], [0], [0], [1], [0, 0, 1, 1], [], []>} : vector<8x512xbf16>, vector<512x128xbf16>, vector<8x128xf32> -> vector<8x128xf32>
    %cst_15 = arith.constant dense<0.000000e+00> : vector<8x128xf32>
    %198 = tpu.matmul %196, %2, %cst_15 {dimension_numbers = #tpu.dot_dimension_numbers<[1], [0], [0], [1], [0, 0, 1, 1], [], []>} : vector<8x512xbf16>, vector<512x128xbf16>, vector<8x128xf32> -> vector<8x128xf32>
    %199 = arith.addf %197, %198 : vector<8x128xf32>
    %200 = arith.maximumf %167, %199 : vector<8x128xf32>
    %201 = vector.extract_strided_slice %0 {offsets = [0, 6], sizes = [8, 1], strides = [1, 1]} : vector<8x32xi32> to vector<8x1xi32>
    %202 = vector.broadcast %201 : vector<8x1xi32> to vector<8x128xi32>
    %203 = vector.broadcast %3 : vector<1x128xi32> to vector<8x128xi32>
    %204 = arith.cmpi eq, %202, %203 : vector<8x128xi32>
    %205 = arith.extui %204 : vector<8x128xi1> to vector<8x128xi32>
    %206 = arith.sitofp %205 : vector<8x128xi32> to vector<8x128xf32>
    %207 = arith.truncf %206 : vector<8x128xf32> to vector<8x128xbf16>
    %208 = vector.extract_strided_slice %0 {offsets = [0, 14], sizes = [8, 1], strides = [1, 1]} : vector<8x32xi32> to vector<8x1xi32>
    %209 = vector.broadcast %208 : vector<8x1xi32> to vector<8x128xi32>
    %210 = vector.broadcast %3 : vector<1x128xi32> to vector<8x128xi32>
    %211 = arith.cmpi eq, %209, %210 : vector<8x128xi32>
    %212 = arith.extui %211 : vector<8x128xi1> to vector<8x128xi32>
    %213 = arith.sitofp %212 : vector<8x128xi32> to vector<8x128xf32>
    %214 = arith.truncf %213 : vector<8x128xf32> to vector<8x128xbf16>
    %215 = vector.extract_strided_slice %0 {offsets = [0, 22], sizes = [8, 1], strides = [1, 1]} : vector<8x32xi32> to vector<8x1xi32>
    %216 = vector.broadcast %215 : vector<8x1xi32> to vector<8x128xi32>
    %217 = vector.broadcast %3 : vector<1x128xi32> to vector<8x128xi32>
    %218 = arith.cmpi eq, %216, %217 : vector<8x128xi32>
    %219 = arith.extui %218 : vector<8x128xi1> to vector<8x128xi32>
    %220 = arith.sitofp %219 : vector<8x128xi32> to vector<8x128xf32>
    %221 = arith.truncf %220 : vector<8x128xf32> to vector<8x128xbf16>
    %222 = vector.extract_strided_slice %0 {offsets = [0, 30], sizes = [8, 1], strides = [1, 1]} : vector<8x32xi32> to vector<8x1xi32>
    %223 = vector.broadcast %222 : vector<8x1xi32> to vector<8x128xi32>
    %224 = vector.broadcast %3 : vector<1x128xi32> to vector<8x128xi32>
    %225 = arith.cmpi eq, %223, %224 : vector<8x128xi32>
    %226 = arith.extui %225 : vector<8x128xi1> to vector<8x128xi32>
    %227 = arith.sitofp %226 : vector<8x128xi32> to vector<8x128xf32>
    %228 = arith.truncf %227 : vector<8x128xf32> to vector<8x128xbf16>
    %229 = tpu.concatenate %207, %214, %221, %228 in 1 : vector<8x128xbf16>, vector<8x128xbf16>, vector<8x128xbf16>, vector<8x128xbf16> -> vector<8x512xbf16>
    %cst_16 = arith.constant dense<0.000000e+00> : vector<8x128xf32>
    %230 = tpu.matmul %229, %1, %cst_16 {dimension_numbers = #tpu.dot_dimension_numbers<[1], [0], [0], [1], [0, 0, 1, 1], [], []>} : vector<8x512xbf16>, vector<512x128xbf16>, vector<8x128xf32> -> vector<8x128xf32>
    %cst_17 = arith.constant dense<0.000000e+00> : vector<8x128xf32>
    %231 = tpu.matmul %229, %2, %cst_17 {dimension_numbers = #tpu.dot_dimension_numbers<[1], [0], [0], [1], [0, 0, 1, 1], [], []>} : vector<8x512xbf16>, vector<512x128xbf16>, vector<8x128xf32> -> vector<8x128xf32>
    %232 = arith.addf %230, %231 : vector<8x128xf32>
    %233 = arith.maximumf %200, %232 : vector<8x128xf32>
    %234 = vector.extract_strided_slice %0 {offsets = [0, 7], sizes = [8, 1], strides = [1, 1]} : vector<8x32xi32> to vector<8x1xi32>
    %235 = vector.broadcast %234 : vector<8x1xi32> to vector<8x128xi32>
    %236 = vector.broadcast %3 : vector<1x128xi32> to vector<8x128xi32>
    %237 = arith.cmpi eq, %235, %236 : vector<8x128xi32>
    %238 = arith.extui %237 : vector<8x128xi1> to vector<8x128xi32>
    %239 = arith.sitofp %238 : vector<8x128xi32> to vector<8x128xf32>
    %240 = arith.truncf %239 : vector<8x128xf32> to vector<8x128xbf16>
    %241 = vector.extract_strided_slice %0 {offsets = [0, 15], sizes = [8, 1], strides = [1, 1]} : vector<8x32xi32> to vector<8x1xi32>
    %242 = vector.broadcast %241 : vector<8x1xi32> to vector<8x128xi32>
    %243 = vector.broadcast %3 : vector<1x128xi32> to vector<8x128xi32>
    %244 = arith.cmpi eq, %242, %243 : vector<8x128xi32>
    %245 = arith.extui %244 : vector<8x128xi1> to vector<8x128xi32>
    %246 = arith.sitofp %245 : vector<8x128xi32> to vector<8x128xf32>
    %247 = arith.truncf %246 : vector<8x128xf32> to vector<8x128xbf16>
    %248 = vector.extract_strided_slice %0 {offsets = [0, 23], sizes = [8, 1], strides = [1, 1]} : vector<8x32xi32> to vector<8x1xi32>
    %249 = vector.broadcast %248 : vector<8x1xi32> to vector<8x128xi32>
    %250 = vector.broadcast %3 : vector<1x128xi32> to vector<8x128xi32>
    %251 = arith.cmpi eq, %249, %250 : vector<8x128xi32>
    %252 = arith.extui %251 : vector<8x128xi1> to vector<8x128xi32>
    %253 = arith.sitofp %252 : vector<8x128xi32> to vector<8x128xf32>
    %254 = arith.truncf %253 : vector<8x128xf32> to vector<8x128xbf16>
    %255 = vector.extract_strided_slice %0 {offsets = [0, 31], sizes = [8, 1], strides = [1, 1]} : vector<8x32xi32> to vector<8x1xi32>
    %256 = vector.broadcast %255 : vector<8x1xi32> to vector<8x128xi32>
    %257 = vector.broadcast %3 : vector<1x128xi32> to vector<8x128xi32>
    %258 = arith.cmpi eq, %256, %257 : vector<8x128xi32>
    %259 = arith.extui %258 : vector<8x128xi1> to vector<8x128xi32>
    %260 = arith.sitofp %259 : vector<8x128xi32> to vector<8x128xf32>
    %261 = arith.truncf %260 : vector<8x128xf32> to vector<8x128xbf16>
    %262 = tpu.concatenate %240, %247, %254, %261 in 1 : vector<8x128xbf16>, vector<8x128xbf16>, vector<8x128xbf16>, vector<8x128xbf16> -> vector<8x512xbf16>
    %cst_18 = arith.constant dense<0.000000e+00> : vector<8x128xf32>
    %263 = tpu.matmul %262, %1, %cst_18 {dimension_numbers = #tpu.dot_dimension_numbers<[1], [0], [0], [1], [0, 0, 1, 1], [], []>} : vector<8x512xbf16>, vector<512x128xbf16>, vector<8x128xf32> -> vector<8x128xf32>
    %cst_19 = arith.constant dense<0.000000e+00> : vector<8x128xf32>
    %264 = tpu.matmul %262, %2, %cst_19 {dimension_numbers = #tpu.dot_dimension_numbers<[1], [0], [0], [1], [0, 0, 1, 1], [], []>} : vector<8x512xbf16>, vector<512x128xbf16>, vector<8x128xf32> -> vector<8x128xf32>
    %265 = arith.addf %263, %264 : vector<8x128xf32>
    %266 = arith.maximumf %233, %265 : vector<8x128xf32>
    %c0_20 = arith.constant 0 : index
    %c0_21 = arith.constant 0 : index
    %267 = vector.load %arg4[%c0_20, %c0_21] : memref<8x128xf32, #tpu.memory_space<vmem>>, vector<8x128xf32>
    tpu.vector_store %arg4[%c0_20, %c0_21], %266 {strides = array<i32>} : memref<8x128xf32, #tpu.memory_space<vmem>>, vector<8x128xf32>,
    return
  }
  func.func @transform_0(%arg0: i32) -> (i32, i32) {
    %c0_i32 = arith.constant 0 : i32
    %c0_i32_0 = arith.constant 0 : i32
    return %arg0, %c0_i32 : i32, i32
  }
  func.func @transform_1(%arg0: i32) -> (i32, i32) {
    %c0_i32 = arith.constant 0 : i32
    %c0_i32_0 = arith.constant 0 : i32
    %c0_i32_1 = arith.constant 0 : i32
    return %c0_i32, %c0_i32_0 : i32, i32
  }
  func.func @transform_2(%arg0: i32) -> (i32, i32) {
    %c0_i32 = arith.constant 0 : i32
    %c0_i32_0 = arith.constant 0 : i32
    %c0_i32_1 = arith.constant 0 : i32
    return %c0_i32, %c0_i32_0 : i32, i32
  }
  func.func @transform_3(%arg0: i32) -> (i32, i32) {
    %c0_i32 = arith.constant 0 : i32
    %c0_i32_0 = arith.constant 0 : i32
    return %arg0, %c0_i32 : i32, i32
  }
}

</mosaic_0001>

<llo_original>
// kernel: tpu_custom_call.1
$region0: #{tpu_custom_call.1}
  #allocation0 [shape = 'u32[]', space=smem, size = 0x4, offset = 0x4, fixed_abs, tag = 'smem constant byte address 0x4 - core index']
  #allocation1 [shape = 'u32[144,128]{1,0:T(1,128)}', space=vmem, size = 0x12000, scoped, tag = 'internal scratch']
  %s0 = inlined_call_operand.hbm [shape: s32[8,32], index: 0, kind: input, shape index: {}]
  %s1 = inlined_call_operand.hbm [shape: bf16[512,128], index: 1, kind: input, shape index: {}]
  %s2 = inlined_call_operand.hbm [shape: bf16[512,128], index: 2, kind: input, shape index: {}]
  %s3 = inlined_call_operand.hbm [shape: f32[8,128], index: 3, kind: output, shape index: {}]
  %s4 = sld [smem:[#allocation0]]
  $region34: #{tpu_custom_call.1} parent=0
    _
  %s6 = ssub.s32 1, %s4
  %s7 = scalar_select 0, %s6, %s4
  $region1: #{tpu_custom_call.1} parent=0
    #allocation2 [shape = 'u8[4096]{0}', space=vmem, size = 0x1000, scoped, tag = 'input window, operand 0, single buffered']
    #allocation3 [shape = 's32[1]{0}', space=sflag, size = 0x4, scoped, tag = 'scoped memory for tpu_custom_call.1']
    #allocation4 [shape = 's32[1]{0}', space=sflag, size = 0x4, scoped, tag = 'scoped memory for tpu_custom_call.1']
    #allocation5 [shape = 'u8[131072]{0}', space=vmem, size = 0x20000, scoped, tag = 'input window, operand 1, single buffered']
    #allocation6 [shape = 's32[1]{0}', space=sflag, size = 0x4, scoped, tag = 'scoped memory for tpu_custom_call.1']
    #allocation7 [shape = 'u8[131072]{0}', space=vmem, size = 0x20000, scoped, tag = 'input window, operand 2, single buffered']
    #allocation8 [shape = 'u8[4096]{0}', space=vmem, size = 0x1000, scoped, tag = 'output window, operand 0, single buffered']
    %8 = vsyncpa [#allocation3], 0
    %9 = vsyncpa [#allocation6], 0
    %10 = vsyncpa [#allocation4], 0
    // Predicated region
    $region2: #{tpu_custom_call.1} parent=1 // pred_check
      _
    $region3: #{tpu_custom_call.1} parent=1 // pred_check_branch
      %12 = sbr.rel (0) target = $region5
    $region4: #{tpu_custom_call.1} parent=1 // pred_region
      %s14 = ssub.s32 128, 128
      %15 = vsyncadd [#allocation3], %s14
      %s17 = sshll.u32 [#allocation2], 4
      %s18 = int_to_ptr.vmem [resolvable:$true] %s17
      %20 = dma.hbm_to_vmem [thread:$0]  %s0, 128, %s18, [#allocation3]
    $region5: #{tpu_custom_call.1} parent=1 // pred_fallthru
      _
    // Predicated region
    $region6: #{tpu_custom_call.1} parent=1 // pred_check
      _
    $region7: #{tpu_custom_call.1} parent=1 // pred_check_branch
      %22 = sbr.rel (0) target = $region9
    $region8: #{tpu_custom_call.1} parent=1 // pred_region
      %s24 = ssub.s32 4096, 4096
      %25 = vsyncadd [#allocation6], %s24
      %s26 = sshll.u32 [#allocation5], 4
      %s27 = int_to_ptr.vmem [resolvable:$true] %s26
      %32 = dma.hbm_to_vmem [thread:$0]  %s1, 4096, %s27, [#allocation6], 64, 64, 4
    $region9: #{tpu_custom_call.1} parent=1 // pred_fallthru
      _
    // Predicated region
    $region10: #{tpu_custom_call.1} parent=1 // pred_check
      _
    $region11: #{tpu_custom_call.1} parent=1 // pred_check_branch
      %34 = sbr.rel (0) target = $region13
    $region12: #{tpu_custom_call.1} parent=1 // pred_region
      %s36 = ssub.s32 4096, 4096
      %37 = vsyncadd [#allocation6], %s36
      %s38 = sshll.u32 [#allocation7], 4
      %s39 = int_to_ptr.vmem [resolvable:$true] %s38
      %44 = dma.hbm_to_vmem [thread:$0]  %s2, 4096, %s39, [#allocation6], 64, 64, 4
    $region13: #{tpu_custom_call.1} parent=1 // pred_fallthru
      _
    // Predicated region
    $region14: #{tpu_custom_call.1} parent=1 // pred_check
      _
    $region15: #{tpu_custom_call.1} parent=1 // pred_check_branch
      %46 = sbr.rel (0) target = $region17
    $region16: #{tpu_custom_call.1} parent=1 // pred_region
      %47 = dma.done [#allocation3], 128
    $region17: #{tpu_custom_call.1} parent=1 // pred_fallthru
      _
    // Predicated region
    $region18: #{tpu_custom_call.1} parent=1 // pred_check
      _
    $region19: #{tpu_custom_call.1} parent=1 // pred_check_branch
      %49 = sbr.rel (0) target = $region21
    $region20: #{tpu_custom_call.1} parent=1 // pred_region
      %50 = dma.done [#allocation6], 4096
    $region21: #{tpu_custom_call.1} parent=1 // pred_fallthru
      _
    // Predicated region
    $region22: #{tpu_custom_call.1} parent=1 // pred_check
      _
    $region23: #{tpu_custom_call.1} parent=1 // pred_check_branch
      %52 = sbr.rel (0) target = $region25
    $region24: #{tpu_custom_call.1} parent=1 // pred_region
      %53 = dma.done [#allocation6], 4096
    $region25: #{tpu_custom_call.1} parent=1 // pred_fallthru
      _
    %v55 = vld [vmem:[#allocation2] sm:$0xff]
    %v56 = vld [vmem:[#allocation5] sm:$0xf]
    %v57 = vld [vmem:[#allocation5 + $0x4] sm:$0xf]
    %v58 = vld [vmem:[#allocation5 + $0x8] sm:$0xf]
    %v59 = vld [vmem:[#allocation5 + $0xc] sm:$0xf]
    %v60 = vld [vmem:[#allocation5 + $0x10] sm:$0xf]
    %v61 = vld [vmem:[#allocation5 + $0x14] sm:$0xf]
    %v62 = vld [vmem:[#allocation5 + $0x18] sm:$0xf]
    %v63 = vld [vmem:[#allocation5 + $0x1c] sm:$0xf]
    %v64 = vld [vmem:[#allocation5 + $0x20] sm:$0xf]
    %v65 = vld [vmem:[#allocation5 + $0x24] sm:$0xf]
    %v66 = vld [vmem:[#allocation5 + $0x28] sm:$0xf]
    %v67 = vld [vmem:[#allocation5 + $0x2c] sm:$0xf]
    %v68 = vld [vmem:[#allocation5 + $0x30] sm:$0xf]
    %v69 = vld [vmem:[#allocation5 + $0x34] sm:$0xf]
    %v70 = vld [vmem:[#allocation5 + $0x38] sm:$0xf]
    %v71 = vld [vmem:[#allocation5 + $0x3c] sm:$0xf]
    %v72 = vld [vmem:[#allocation5 + $0x40] sm:$0xf]
    %v73 = vld [vmem:[#allocation5 + $0x44] sm:$0xf]
    %v74 = vld [vmem:[#allocation5 + $0x48] sm:$0xf]
    %v75 = vld [vmem:[#allocation5 + $0x4c] sm:$0xf]
    %v76 = vld [vmem:[#allocation5 + $0x50] sm:$0xf]
    %v77 = vld [vmem:[#allocation5 + $0x54] sm:$0xf]
    %v78 = vld [vmem:[#allocation5 + $0x58] sm:$0xf]
    %v79 = vld [vmem:[#allocation5 + $0x5c] sm:$0xf]
    %v80 = vld [vmem:[#allocation5 + $0x60] sm:$0xf]
    %v81 = vld [vmem:[#allocation5 + $0x64] sm:$0xf]
    %v82 = vld [vmem:[#allocation5 + $0x68] sm:$0xf]
    %v83 = vld [vmem:[#allocation5 + $0x6c] sm:$0xf]
    %v84 = vld [vmem:[#allocation5 + $0x70] sm:$0xf]
    %v85 = vld [vmem:[#allocation5 + $0x74] sm:$0xf]
    %v86 = vld [vmem:[#allocation5 + $0x78] sm:$0xf]
    %v87 = vld [vmem:[#allocation5 + $0x7c] sm:$0xf]
    %v88 = vld [vmem:[#allocation5 + $0x80] sm:$0xf]
    %v89 = vld [vmem:[#allocation5 + $0x84] sm:$0xf]
    %v90 = vld [vmem:[#allocation5 + $0x88] sm:$0xf]
    %v91 = vld [vmem:[#allocation5 + $0x8c] sm:$0xf]
    %v92 = vld [vmem:[#allocation5 + $0x90] sm:$0xf]
    %v93 = vld [vmem:[#allocation5 + $0x94] sm:$0xf]
    %v94 = vld [vmem:[#allocation5 + $0x98] sm:$0xf]
    %v95 = vld [vmem:[#allocation5 + $0x9c] sm:$0xf]
    %v96 = vld [vmem:[#allocation5 + $0xa0] sm:$0xf]
    %v97 = vld [vmem:[#allocation5 + $0xa4] sm:$0xf]
    %v98 = vld [vmem:[#allocation5 + $0xa8] sm:$0xf]
    %v99 = vld [vmem:[#allocation5 + $0xac] sm:$0xf]
    %v100 = vld [vmem:[#allocation5 + $0xb0] sm:$0xf]
    %v101 = vld [vmem:[#allocation5 + $0xb4] sm:$0xf]
    %v102 = vld [vmem:[#allocation5 + $0xb8] sm:$0xf]
    %v103 = vld [vmem:[#allocation5 + $0xbc] sm:$0xf]
    %v104 = vld [vmem:[#allocation5 + $0xc0] sm:$0xf]
    %v105 = vld [vmem:[#allocation5 + $0xc4] sm:$0xf]
    %v106 = vld [vmem:[#allocation5 + $0xc8] sm:$0xf]
    %v107 = vld [vmem:[#allocation5 + $0xcc] sm:$0xf]
    %v108 = vld [vmem:[#allocation5 + $0xd0] sm:$0xf]
    %v109 = vld [vmem:[#allocation5 + $0xd4] sm:$0xf]
    %v110 = vld [vmem:[#allocation5 + $0xd8] sm:$0xf]
    %v111 = vld [vmem:[#allocation5 + $0xdc] sm:$0xf]
    %v112 = vld [vmem:[#allocation5 + $0xe0] sm:$0xf]
    %v113 = vld [vmem:[#allocation5 + $0xe4] sm:$0xf]
    %v114 = vld [vmem:[#allocation5 + $0xe8] sm:$0xf]
    %v115 = vld [vmem:[#allocation5 + $0xec] sm:$0xf]
    %v116 = vld [vmem:[#allocation5 + $0xf0] sm:$0xf]
    %v117 = vld [vmem:[#allocation5 + $0xf4] sm:$0xf]
    %v118 = vld [vmem:[#allocation5 + $0xf8] sm:$0xf]
    %v119 = vld [vmem:[#allocation5 + $0xfc] sm:$0xf]
    %v120 = vld [vmem:[#allocation7] sm:$0xf]
    %v121 = vld [vmem:[#allocation7 + $0x4] sm:$0xf]
    %v122 = vld [vmem:[#allocation7 + $0x8] sm:$0xf]
    %v123 = vld [vmem:[#allocation7 + $0xc] sm:$0xf]
    %v124 = vld [vmem:[#allocation7 + $0x10] sm:$0xf]
    %v125 = vld [vmem:[#allocation7 + $0x14] sm:$0xf]
    %v126 = vld [vmem:[#allocation7 + $0x18] sm:$0xf]
    %v127 = vld [vmem:[#allocation7 + $0x1c] sm:$0xf]
    %v128 = vld [vmem:[#allocation7 + $0x20] sm:$0xf]
    %v129 = vld [vmem:[#allocation7 + $0x24] sm:$0xf]
    %v130 = vld [vmem:[#allocation7 + $0x28] sm:$0xf]
    %v131 = vld [vmem:[#allocation7 + $0x2c] sm:$0xf]
    %v132 = vld [vmem:[#allocation7 + $0x30] sm:$0xf]
    %v133 = vld [vmem:[#allocation7 + $0x34] sm:$0xf]
    %v134 = vld [vmem:[#allocation7 + $0x38] sm:$0xf]
    %v135 = vld [vmem:[#allocation7 + $0x3c] sm:$0xf]
    %v136 = vld [vmem:[#allocation7 + $0x40] sm:$0xf]
    %v137 = vld [vmem:[#allocation7 + $0x44] sm:$0xf]
    %v138 = vld [vmem:[#allocation7 + $0x48] sm:$0xf]
    %v139 = vld [vmem:[#allocation7 + $0x4c] sm:$0xf]
    %v140 = vld [vmem:[#allocation7 + $0x50] sm:$0xf]
    %v141 = vld [vmem:[#allocation7 + $0x54] sm:$0xf]
    %v142 = vld [vmem:[#allocation7 + $0x58] sm:$0xf]
    %v143 = vld [vmem:[#allocation7 + $0x5c] sm:$0xf]
    %v144 = vld [vmem:[#allocation7 + $0x60] sm:$0xf]
    %v145 = vld [vmem:[#allocation7 + $0x64] sm:$0xf]
    %v146 = vld [vmem:[#allocation7 + $0x68] sm:$0xf]
    %v147 = vld [vmem:[#allocation7 + $0x6c] sm:$0xf]
    %v148 = vld [vmem:[#allocation7 + $0x70] sm:$0xf]
    %v149 = vld [vmem:[#allocation7 + $0x74] sm:$0xf]
    %v150 = vld [vmem:[#allocation7 + $0x78] sm:$0xf]
    %v151 = vld [vmem:[#allocation7 + $0x7c] sm:$0xf]
    %v152 = vld [vmem:[#allocation7 + $0x80] sm:$0xf]
    %v153 = vld [vmem:[#allocation7 + $0x84] sm:$0xf]
    %v154 = vld [vmem:[#allocation7 + $0x88] sm:$0xf]
    %v155 = vld [vmem:[#allocation7 + $0x8c] sm:$0xf]
    %v156 = vld [vmem:[#allocation7 + $0x90] sm:$0xf]
    %v157 = vld [vmem:[#allocation7 + $0x94] sm:$0xf]
    %v158 = vld [vmem:[#allocation7 + $0x98] sm:$0xf]
    %v159 = vld [vmem:[#allocation7 + $0x9c] sm:$0xf]
    %v160 = vld [vmem:[#allocation7 + $0xa0] sm:$0xf]
    %v161 = vld [vmem:[#allocation7 + $0xa4] sm:$0xf]
    %v162 = vld [vmem:[#allocation7 + $0xa8] sm:$0xf]
    %v163 = vld [vmem:[#allocation7 + $0xac] sm:$0xf]
    %v164 = vld [vmem:[#allocation7 + $0xb0] sm:$0xf]
    %v165 = vld [vmem:[#allocation7 + $0xb4] sm:$0xf]
    %v166 = vld [vmem:[#allocation7 + $0xb8] sm:$0xf]
    %v167 = vld [vmem:[#allocation7 + $0xbc] sm:$0xf]
    %v168 = vld [vmem:[#allocation7 + $0xc0] sm:$0xf]
    %v169 = vld [vmem:[#allocation7 + $0xc4] sm:$0xf]
    %v170 = vld [vmem:[#allocation7 + $0xc8] sm:$0xf]
    %v171 = vld [vmem:[#allocation7 + $0xcc] sm:$0xf]
    %v172 = vld [vmem:[#allocation7 + $0xd0] sm:$0xf]
    %v173 = vld [vmem:[#allocation7 + $0xd4] sm:$0xf]
    %v174 = vld [vmem:[#allocation7 + $0xd8] sm:$0xf]
    %v175 = vld [vmem:[#allocation7 + $0xdc] sm:$0xf]
    %v176 = vld [vmem:[#allocation7 + $0xe0] sm:$0xf]
    %v177 = vld [vmem:[#allocation7 + $0xe4] sm:$0xf]
    %v178 = vld [vmem:[#allocation7 + $0xe8] sm:$0xf]
    %v179 = vld [vmem:[#allocation7 + $0xec] sm:$0xf]
    %v180 = vld [vmem:[#allocation7 + $0xf0] sm:$0xf]
    %v181 = vld [vmem:[#allocation7 + $0xf4] sm:$0xf]
    %v182 = vld [vmem:[#allocation7 + $0xf8] sm:$0xf]
    %v183 = vld [vmem:[#allocation7 + $0xfc] sm:$0xf]
    %v184 = vlaneseq
    %v185 = vand.u32 %v184, 127
    %186 = vset.pattern.permute.xlu0 0
    %187 = vperm.xlu0 %186, %v55
    %v188 = vpop.permute.xlu0 %187
    %vm189 = vcmp.eq.s32.totalorder %v188, %v185
    %v190 = vsel %vm189, 1, 0
    %v191 = vcvt.s32.f32 %v190
    %v192 = vpack.c.bf16 %v191, %v191
    %193 = vset.pattern.permute.xlu0 8
    %194 = vperm.xlu0 %193, %v55
    %v195 = vpop.permute.xlu0 %194
    %vm196 = vcmp.eq.s32.totalorder %v195, %v185
    %v197 = vsel %vm196, 1, 0
    %v198 = vcvt.s32.f32 %v197
    %v199 = vpack.c.bf16 %v198, %v198
    %200 = vset.pattern.permute.xlu0 16
    %201 = vperm.xlu0 %200, %v55
    %v202 = vpop.permute.xlu0 %201
    %vm203 = vcmp.eq.s32.totalorder %v202, %v185
    %v204 = vsel %vm203, 1, 0
    %v205 = vcvt.s32.f32 %v204
    %v206 = vpack.c.bf16 %v205, %v205
    %207 = vset.pattern.permute.xlu0 24
    %208 = vperm.xlu0 %207, %v55
    %v209 = vpop.permute.xlu0 %208
    %vm210 = vcmp.eq.s32.totalorder %v209, %v185
    %v211 = vsel %vm210, 1, 0
    %v212 = vcvt.s32.f32 %v211
    %v213 = vpack.c.bf16 %v212, %v212
    %v278 = vunpack.c.l.b16 %v120
    %v279 = vunpack.c.l.b16 %v121
    %v280 = vunpack.c.l.b16 %v122
    %v281 = vunpack.c.l.b16 %v123
    %v282 = vunpack.c.l.b16 %v124
    %v283 = vunpack.c.l.b16 %v125
    %v284 = vunpack.c.l.b16 %v126
    %v285 = vunpack.c.l.b16 %v127
    %v286 = vunpack.c.l.b16 %v128
    %v287 = vunpack.c.l.b16 %v129
    %v288 = vunpack.c.l.b16 %v130
    %v289 = vunpack.c.l.b16 %v131
    %v290 = vunpack.c.l.b16 %v132
    %v291 = vunpack.c.l.b16 %v133
    %v292 = vunpack.c.l.b16 %v134
    %v293 = vunpack.c.l.b16 %v135
    %v294 = vunpack.c.l.b16 %v136
    %v295 = vunpack.c.l.b16 %v137
    %v296 = vunpack.c.l.b16 %v138
    %v297 = vunpack.c.l.b16 %v139
    %v298 = vunpack.c.l.b16 %v140
    %v299 = vunpack.c.l.b16 %v141
    %v300 = vunpack.c.l.b16 %v142
    %v301 = vunpack.c.l.b16 %v143
    %v302 = vunpack.c.l.b16 %v144
    %v303 = vunpack.c.l.b16 %v145
    %v304 = vunpack.c.l.b16 %v146
    %v305 = vunpack.c.l.b16 %v147
    %v306 = vunpack.c.l.b16 %v148
    %v307 = vunpack.c.l.b16 %v149
    %v308 = vunpack.c.l.b16 %v150
    %v309 = vunpack.c.l.b16 %v151
    %v310 = vunpack.c.l.b16 %v152
    %v311 = vunpack.c.l.b16 %v153
    %v312 = vunpack.c.l.b16 %v154
    %v313 = vunpack.c.l.b16 %v155
    %v314 = vunpack.c.l.b16 %v156
    %v315 = vunpack.c.l.b16 %v157
    %v316 = vunpack.c.l.b16 %v158
    %v317 = vunpack.c.l.b16 %v159
    %v318 = vunpack.c.l.b16 %v160
    %v319 = vunpack.c.l.b16 %v161
    %v320 = vunpack.c.l.b16 %v162
    %v321 = vunpack.c.l.b16 %v163
    %v322 = vunpack.c.l.b16 %v164
    %v323 = vunpack.c.l.b16 %v165
    %v324 = vunpack.c.l.b16 %v166
    %v325 = vunpack.c.l.b16 %v167
    %v326 = vunpack.c.l.b16 %v168
    %v327 = vunpack.c.l.b16 %v169
    %v328 = vunpack.c.l.b16 %v170
    %v329 = vunpack.c.l.b16 %v171
    %v330 = vunpack.c.l.b16 %v172
    %v331 = vunpack.c.l.b16 %v173
    %v332 = vunpack.c.l.b16 %v174
    %v333 = vunpack.c.l.b16 %v175
    %v334 = vunpack.c.l.b16 %v176
    %v335 = vunpack.c.l.b16 %v177
    %v336 = vunpack.c.l.b16 %v178
    %v337 = vunpack.c.l.b16 %v179
    %v338 = vunpack.c.l.b16 %v180
    %v339 = vunpack.c.l.b16 %v181
    %v340 = vunpack.c.l.b16 %v182
    %v341 = vunpack.c.l.b16 %v183
    %v342 = vpack.c.b16 %v279, %v278
    %v343 = vpack.c.b16 %v281, %v280
    %v344 = vpack.c.b16 %v283, %v282
    %v345 = vpack.c.b16 %v285, %v284
    %v346 = vpack.c.b16 %v287, %v286
    %v347 = vpack.c.b16 %v289, %v288
    %v348 = vpack.c.b16 %v291, %v290
    %v349 = vpack.c.b16 %v293, %v292
    %v350 = vpack.c.b16 %v295, %v294
    %v351 = vpack.c.b16 %v297, %v296
    %v352 = vpack.c.b16 %v299, %v298
    %v353 = vpack.c.b16 %v301, %v300
    %v354 = vpack.c.b16 %v303, %v302
    %v355 = vpack.c.b16 %v305, %v304
    %v356 = vpack.c.b16 %v307, %v306
    %v357 = vpack.c.b16 %v309, %v308
    %v358 = vpack.c.b16 %v311, %v310
    %v359 = vpack.c.b16 %v313, %v312
    %v360 = vpack.c.b16 %v315, %v314
    %v361 = vpack.c.b16 %v317, %v316
    %v362 = vpack.c.b16 %v319, %v318
    %v363 = vpack.c.b16 %v321, %v320
    %v364 = vpack.c.b16 %v323, %v322
    %v365 = vpack.c.b16 %v325, %v324
    %v366 = vpack.c.b16 %v327, %v326
    %v367 = vpack.c.b16 %v329, %v328
    %v368 = vpack.c.b16 %v331, %v330
    %v369 = vpack.c.b16 %v333, %v332
    %v370 = vpack.c.b16 %v335, %v334
    %v371 = vpack.c.b16 %v337, %v336
    %v372 = vpack.c.b16 %v339, %v338
    %v373 = vpack.c.b16 %v341, %v340
    %406 = vmatprep.subr.bf16.mxu0 0
    %407 = vmatpush1.bf16.msra.mxu0 %v349
    %408 = vmatprep.subr.bf16.mxu0 0
    %409 = vmatpush1.bf16.msra.mxu0 %v348
    %410 = vmatprep.subr.bf16.mxu0 0
    %411 = vmatpush1.bf16.msra.mxu0 %v347
    %412 = vmatprep.subr.bf16.mxu0 0
    %413 = vmatpush1.bf16.msra.mxu0 %v346
    %414 = vmatprep.subr.bf16.mxu0 0
    %415 = vmatpush1.bf16.msra.mxu0 %v345
    %416 = vmatprep.subr.bf16.mxu0 0
    %417 = vmatpush1.bf16.msra.mxu0 %v344
    %418 = vmatprep.subr.bf16.mxu0 0
    %419 = vmatpush1.bf16.msra.mxu0 %v343
    %420 = vmatprep.subr.bf16.mxu0 0
    %421 = vmatpush1.bf16.msra.mxu0 %v342
    %422 = vmatprep.subr.bf16.mxu0 0
    %423 = vmatpush2.bf16.msra.mxu0 %v357
    %424 = vmatprep.subr.bf16.mxu0 0
    %425 = vmatpush2.bf16.msra.mxu0 %v356
    %426 = vmatprep.subr.bf16.mxu0 0
    %427 = vmatpush2.bf16.msra.mxu0 %v355
    %428 = vmatprep.subr.bf16.mxu0 0
    %429 = vmatpush2.bf16.msra.mxu0 %v354
    %430 = vmatprep.subr.bf16.mxu0 0
    %431 = vmatpush2.bf16.msra.mxu0 %v353
    %432 = vmatprep.subr.bf16.mxu0 0
    %433 = vmatpush2.bf16.msra.mxu0 %v352
    %434 = vmatprep.subr.bf16.mxu0 0
    %435 = vmatpush2.bf16.msra.mxu0 %v351
    %436 = vmatprep.subr.bf16.mxu0 0
    %437 = vmatpush2.bf16.msra.mxu0 %v350
    %438 = vmatprep.mubr.bf16.mxu0 %v199
    %439 = vmatmul.mubr.bf16.gmra.mxu0 %v192
    %v440 = vpop.f32.mrf.mxu0
    %v441 = vadd.f32 0.0, %v440
    %v442 = vpop.f32.mrf.mxu0
    %v443 = vpop.f32.mrf.mxu0
    %v444 = vpop.f32.mrf.mxu0
    %445 = vdwg.mxu0
    %446 = vmatprep.subr.bf16.mxu0 0
    %447 = vmatpush1.bf16.msra.mxu0 %v365
    %448 = vmatprep.subr.bf16.mxu0 0
    %449 = vmatpush1.bf16.msra.mxu0 %v364
    %450 = vmatprep.subr.bf16.mxu0 0
    %451 = vmatpush1.bf16.msra.mxu0 %v363
    %452 = vmatprep.subr.bf16.mxu0 0
    %453 = vmatpush1.bf16.msra.mxu0 %v362
    %454 = vmatprep.subr.bf16.mxu0 0
    %455 = vmatpush1.bf16.msra.mxu0 %v361
    %456 = vmatprep.subr.bf16.mxu0 0
    %457 = vmatpush1.bf16.msra.mxu0 %v360
    %458 = vmatprep.subr.bf16.mxu0 0
    %459 = vmatpush1.bf16.msra.mxu0 %v359
    %460 = vmatprep.subr.bf16.mxu0 0
    %461 = vmatpush1.bf16.msra.mxu0 %v358
    %462 = vmatprep.subr.bf16.mxu0 0
    %463 = vmatpush2.bf16.msra.mxu0 %v373
    %464 = vmatprep.subr.bf16.mxu0 0
    %465 = vmatpush2.bf16.msra.mxu0 %v372
    %466 = vmatprep.subr.bf16.mxu0 0
    %467 = vmatpush2.bf16.msra.mxu0 %v371
    %468 = vmatprep.subr.bf16.mxu0 0
    %469 = vmatpush2.bf16.msra.mxu0 %v370
    %470 = vmatprep.subr.bf16.mxu0 0
    %471 = vmatpush2.bf16.msra.mxu0 %v369
    %472 = vmatprep.subr.bf16.mxu0 0
    %473 = vmatpush2.bf16.msra.mxu0 %v368
    %474 = vmatprep.subr.bf16.mxu0 0
    %475 = vmatpush2.bf16.msra.mxu0 %v367
    %476 = vmatprep.subr.bf16.mxu0 0
    %477 = vmatpush2.bf16.msra.mxu0 %v366
    %478 = vmatprep.mubr.bf16.mxu0 %v213
    %479 = vmatmul.mubr.bf16.gmra.mxu0 %v206
    %v480 = vpop.f32.mrf.mxu0
    %v481 = vadd.f32 %v441, %v480
    %v482 = vpop.f32.mrf.mxu0
    %v483 = vpop.f32.mrf.mxu0
    %v484 = vpop.f32.mrf.mxu0
    %485 = vdwg.mxu0
    %v550 = vunpack.c.l.b16 %v56
    %v551 = vunpack.c.l.b16 %v57
    %v552 = vunpack.c.l.b16 %v58
    %v553 = vunpack.c.l.b16 %v59
    %v554 = vunpack.c.l.b16 %v60
    %v555 = vunpack.c.l.b16 %v61
    %v556 = vunpack.c.l.b16 %v62
    %v557 = vunpack.c.l.b16 %v63
    %v558 = vunpack.c.l.b16 %v64
    %v559 = vunpack.c.l.b16 %v65
    %v560 = vunpack.c.l.b16 %v66
    %v561 = vunpack.c.l.b16 %v67
    %v562 = vunpack.c.l.b16 %v68
    %v563 = vunpack.c.l.b16 %v69
    %v564 = vunpack.c.l.b16 %v70
    %v565 = vunpack.c.l.b16 %v71
    %v566 = vunpack.c.l.b16 %v72
    %v567 = vunpack.c.l.b16 %v73
    %v568 = vunpack.c.l.b16 %v74
    %v569 = vunpack.c.l.b16 %v75
    %v570 = vunpack.c.l.b16 %v76
    %v571 = vunpack.c.l.b16 %v77
    %v572 = vunpack.c.l.b16 %v78
    %v573 = vunpack.c.l.b16 %v79
    %v574 = vunpack.c.l.b16 %v80
    %v575 = vunpack.c.l.b16 %v81
    %v576 = vunpack.c.l.b16 %v82
    %v577 = vunpack.c.l.b16 %v83
    %v578 = vunpack.c.l.b16 %v84
    %v579 = vunpack.c.l.b16 %v85
    %v580 = vunpack.c.l.b16 %v86
    %v581 = vunpack.c.l.b16 %v87
    %v582 = vunpack.c.l.b16 %v88
    %v583 = vunpack.c.l.b16 %v89
    %v584 = vunpack.c.l.b16 %v90
    %v585 = vunpack.c.l.b16 %v91
    %v586 = vunpack.c.l.b16 %v92
    %v587 = vunpack.c.l.b16 %v93
    %v588 = vunpack.c.l.b16 %v94
    %v589 = vunpack.c.l.b16 %v95
    %v590 = vunpack.c.l.b16 %v96
    %v591 = vunpack.c.l.b16 %v97
    %v592 = vunpack.c.l.b16 %v98
    %v593 = vunpack.c.l.b16 %v99
    %v594 = vunpack.c.l.b16 %v100
    %v595 = vunpack.c.l.b16 %v101
    %v596 = vunpack.c.l.b16 %v102
    %v597 = vunpack.c.l.b16 %v103
    %v598 = vunpack.c.l.b16 %v104
    %v599 = vunpack.c.l.b16 %v105
    %v600 = vunpack.c.l.b16 %v106
    %v601 = vunpack.c.l.b16 %v107
    %v602 = vunpack.c.l.b16 %v108
    %v603 = vunpack.c.l.b16 %v109
    %v604 = vunpack.c.l.b16 %v110
    %v605 = vunpack.c.l.b16 %v111
    %v606 = vunpack.c.l.b16 %v112
    %v607 = vunpack.c.l.b16 %v113
    %v608 = vunpack.c.l.b16 %v114
    %v609 = vunpack.c.l.b16 %v115
    %v610 = vunpack.c.l.b16 %v116
    %v611 = vunpack.c.l.b16 %v117
    %v612 = vunpack.c.l.b16 %v118
    %v613 = vunpack.c.l.b16 %v119
    %v614 = vpack.c.b16 %v551, %v550
    %v615 = vpack.c.b16 %v553, %v552
    %v616 = vpack.c.b16 %v555, %v554
    %v617 = vpack.c.b16 %v557, %v556
    %v618 = vpack.c.b16 %v559, %v558
    %v619 = vpack.c.b16 %v561, %v560
    %v620 = vpack.c.b16 %v563, %v562
    %v621 = vpack.c.b16 %v565, %v564
    %v622 = vpack.c.b16 %v567, %v566
    %v623 = vpack.c.b16 %v569, %v568
    %v624 = vpack.c.b16 %v571, %v570
    %v625 = vpack.c.b16 %v573, %v572
    %v626 = vpack.c.b16 %v575, %v574
    %v627 = vpack.c.b16 %v577, %v576
    %v628 = vpack.c.b16 %v579, %v578
    %v629 = vpack.c.b16 %v581, %v580
    %v630 = vpack.c.b16 %v583, %v582
    %v631 = vpack.c.b16 %v585, %v584
    %v632 = vpack.c.b16 %v587, %v586
    %v633 = vpack.c.b16 %v589, %v588
    %v634 = vpack.c.b16 %v591, %v590
    %v635 = vpack.c.b16 %v593, %v592
    %v636 = vpack.c.b16 %v595, %v594
    %v637 = vpack.c.b16 %v597, %v596
    %v638 = vpack.c.b16 %v599, %v598
    %v639 = vpack.c.b16 %v601, %v600
    %v640 = vpack.c.b16 %v603, %v602
    %v641 = vpack.c.b16 %v605, %v604
    %v642 = vpack.c.b16 %v607, %v606
    %v643 = vpack.c.b16 %v609, %v608
    %v644 = vpack.c.b16 %v611, %v610
    %v645 = vpack.c.b16 %v613, %v612
    %678 = vmatprep.subr.bf16.mxu0 0
    %679 = vmatpush1.bf16.msra.mxu0 %v621
    %680 = vmatprep.subr.bf16.mxu0 0
    %681 = vmatpush1.bf16.msra.mxu0 %v620
    %682 = vmatprep.subr.bf16.mxu0 0
    %683 = vmatpush1.bf16.msra.mxu0 %v619
    %684 = vmatprep.subr.bf16.mxu0 0
    %685 = vmatpush1.bf16.msra.mxu0 %v618
    %686 = vmatprep.subr.bf16.mxu0 0
    %687 = vmatpush1.bf16.msra.mxu0 %v617
    %688 = vmatprep.subr.bf16.mxu0 0
    %689 = vmatpush1.bf16.msra.mxu0 %v616
    %690 = vmatprep.subr.bf16.mxu0 0
    %691 = vmatpush1.bf16.msra.mxu0 %v615
    %692 = vmatprep.subr.bf16.mxu0 0
    %693 = vmatpush1.bf16.msra.mxu0 %v614
    %694 = vmatprep.subr.bf16.mxu0 0
    %695 = vmatpush2.bf16.msra.mxu0 %v629
    %696 = vmatprep.subr.bf16.mxu0 0
    %697 = vmatpush2.bf16.msra.mxu0 %v628
    %698 = vmatprep.subr.bf16.mxu0 0
    %699 = vmatpush2.bf16.msra.mxu0 %v627
    %700 = vmatprep.subr.bf16.mxu0 0
    %701 = vmatpush2.bf16.msra.mxu0 %v626
    %702 = vmatprep.subr.bf16.mxu0 0
    %703 = vmatpush2.bf16.msra.mxu0 %v625
    %704 = vmatprep.subr.bf16.mxu0 0
    %705 = vmatpush2.bf16.msra.mxu0 %v624
    %706 = vmatprep.subr.bf16.mxu0 0
    %707 = vmatpush2.bf16.msra.mxu0 %v623
    %708 = vmatprep.subr.bf16.mxu0 0
    %709 = vmatpush2.bf16.msra.mxu0 %v622
    %710 = vmatprep.mubr.bf16.mxu0 %v199
    %711 = vmatmul.mubr.bf16.gmra.mxu0 %v192
    %v712 = vpop.f32.mrf.mxu0
    %v713 = vadd.f32 %v481, %v712
    %v714 = vpop.f32.mrf.mxu0
    %v715 = vpop.f32.mrf.mxu0
    %v716 = vpop.f32.mrf.mxu0
    %717 = vdwg.mxu0
    %718 = vmatprep.subr.bf16.mxu0 0
    %719 = vmatpush1.bf16.msra.mxu0 %v637
    %720 = vmatprep.subr.bf16.mxu0 0
    %721 = vmatpush1.bf16.msra.mxu0 %v636
    %722 = vmatprep.subr.bf16.mxu0 0
    %723 = vmatpush1.bf16.msra.mxu0 %v635
    %724 = vmatprep.subr.bf16.mxu0 0
    %725 = vmatpush1.bf16.msra.mxu0 %v634
    %726 = vmatprep.subr.bf16.mxu0 0
    %727 = vmatpush1.bf16.msra.mxu0 %v633
    %728 = vmatprep.subr.bf16.mxu0 0
    %729 = vmatpush1.bf16.msra.mxu0 %v632
    %730 = vmatprep.subr.bf16.mxu0 0
    %731 = vmatpush1.bf16.msra.mxu0 %v631
    %732 = vmatprep.subr.bf16.mxu0 0
    %733 = vmatpush1.bf16.msra.mxu0 %v630
    %734 = vmatprep.subr.bf16.mxu0 0
    %735 = vmatpush2.bf16.msra.mxu0 %v645
    %736 = vmatprep.subr.bf16.mxu0 0
    %737 = vmatpush2.bf16.msra.mxu0 %v644
    %738 = vmatprep.subr.bf16.mxu0 0
    %739 = vmatpush2.bf16.msra.mxu0 %v643
    %740 = vmatprep.subr.bf16.mxu0 0
    %741 = vmatpush2.bf16.msra.mxu0 %v642
    %742 = vmatprep.subr.bf16.mxu0 0
    %743 = vmatpush2.bf16.msra.mxu0 %v641
    %744 = vmatprep.subr.bf16.mxu0 0
    %745 = vmatpush2.bf16.msra.mxu0 %v640
    %746 = vmatprep.subr.bf16.mxu0 0
    %747 = vmatpush2.bf16.msra.mxu0 %v639
    %748 = vmatprep.subr.bf16.mxu0 0
    %749 = vmatpush2.bf16.msra.mxu0 %v638
    %750 = vmatprep.mubr.bf16.mxu0 %v213
    %751 = vmatmul.mubr.bf16.gmra.mxu0 %v206
    %v752 = vpop.f32.mrf.mxu0
    %v753 = vadd.f32 %v713, %v752
    %v754 = vpop.f32.mrf.mxu0
    %v755 = vpop.f32.mrf.mxu0
    %v756 = vpop.f32.mrf.mxu0
    %757 = vdwg.mxu0
    %758 = vset.pattern.permute.xlu0 1
    %759 = vperm.xlu0 %758, %v55
    %v760 = vpop.permute.xlu0 %759
    %vm761 = vcmp.eq.s32.totalorder %v760, %v185
    %v762 = vsel %vm761, 1, 0
    %v763 = vcvt.s32.f32 %v762
    %v764 = vpack.c.bf16 %v763, %v763
    %765 = vset.pattern.permute.xlu0 9
    %766 = vperm.xlu0 %765, %v55
    %v767 = vpop.permute.xlu0 %766
    %vm768 = vcmp.eq.s32.totalorder %v767, %v185
    %v769 = vsel %vm768, 1, 0
    %v770 = vcvt.s32.f32 %v769
    %v771 = vpack.c.bf16 %v770, %v770
    %772 = vset.pattern.permute.xlu0 17
    %773 = vperm.xlu0 %772, %v55
    %v774 = vpop.permute.xlu0 %773
    %vm775 = vcmp.eq.s32.totalorder %v774, %v185
    %v776 = vsel %vm775, 1, 0
    %v777 = vcvt.s32.f32 %v776
    %v778 = vpack.c.bf16 %v777, %v777
    %779 = vset.pattern.permute.xlu0 25
    %780 = vperm.xlu0 %779, %v55
    %v781 = vpop.permute.xlu0 %780
    %vm782 = vcmp.eq.s32.totalorder %v781, %v185
    %v783 = vsel %vm782, 1, 0
    %v784 = vcvt.s32.f32 %v783
    %v785 = vpack.c.bf16 %v784, %v784
    %786 = vmatprep.subr.bf16.mxu0 0
    %787 = vmatpush1.bf16.msra.mxu0 %v349
    %788 = vmatprep.subr.bf16.mxu0 0
    %789 = vmatpush1.bf16.msra.mxu0 %v348
    %790 = vmatprep.subr.bf16.mxu0 0
    %791 = vmatpush1.bf16.msra.mxu0 %v347
    %792 = vmatprep.subr.bf16.mxu0 0
    %793 = vmatpush1.bf16.msra.mxu0 %v346
    %794 = vmatprep.subr.bf16.mxu0 0
    %795 = vmatpush1.bf16.msra.mxu0 %v345
    %796 = vmatprep.subr.bf16.mxu0 0
    %797 = vmatpush1.bf16.msra.mxu0 %v344
    %798 = vmatprep.subr.bf16.mxu0 0
    %799 = vmatpush1.bf16.msra.mxu0 %v343
    %800 = vmatprep.subr.bf16.mxu0 0
    %801 = vmatpush1.bf16.msra.mxu0 %v342
    %802 = vmatprep.subr.bf16.mxu0 0
    %803 = vmatpush2.bf16.msra.mxu0 %v357
    %804 = vmatprep.subr.bf16.mxu0 0
    %805 = vmatpush2.bf16.msra.mxu0 %v356
    %806 = vmatprep.subr.bf16.mxu0 0
    %807 = vmatpush2.bf16.msra.mxu0 %v355
    %808 = vmatprep.subr.bf16.mxu0 0
    %809 = vmatpush2.bf16.msra.mxu0 %v354
    %810 = vmatprep.subr.bf16.mxu0 0
    %811 = vmatpush2.bf16.msra.mxu0 %v353
    %812 = vmatprep.subr.bf16.mxu0 0
    %813 = vmatpush2.bf16.msra.mxu0 %v352
    %814 = vmatprep.subr.bf16.mxu0 0
    %815 = vmatpush2.bf16.msra.mxu0 %v351
    %816 = vmatprep.subr.bf16.mxu0 0
    %817 = vmatpush2.bf16.msra.mxu0 %v350
    %818 = vmatprep.mubr.bf16.mxu0 %v771
    %819 = vmatmul.mubr.bf16.gmra.mxu0 %v764
    %v820 = vpop.f32.mrf.mxu0
    %v821 = vadd.f32 0.0, %v820
    %v822 = vpop.f32.mrf.mxu0
    %v823 = vpop.f32.mrf.mxu0
    %v824 = vpop.f32.mrf.mxu0
    %825 = vdwg.mxu0
    %826 = vmatprep.subr.bf16.mxu0 0
    %827 = vmatpush1.bf16.msra.mxu0 %v365
    %828 = vmatprep.subr.bf16.mxu0 0
    %829 = vmatpush1.bf16.msra.mxu0 %v364
    %830 = vmatprep.subr.bf16.mxu0 0
    %831 = vmatpush1.bf16.msra.mxu0 %v363
    %832 = vmatprep.subr.bf16.mxu0 0
    %833 = vmatpush1.bf16.msra.mxu0 %v362
    %834 = vmatprep.subr.bf16.mxu0 0
    %835 = vmatpush1.bf16.msra.mxu0 %v361
    %836 = vmatprep.subr.bf16.mxu0 0
    %837 = vmatpush1.bf16.msra.mxu0 %v360
    %838 = vmatprep.subr.bf16.mxu0 0
    %839 = vmatpush1.bf16.msra.mxu0 %v359
    %840 = vmatprep.subr.bf16.mxu0 0
    %841 = vmatpush1.bf16.msra.mxu0 %v358
    %842 = vmatprep.subr.bf16.mxu0 0
    %843 = vmatpush2.bf16.msra.mxu0 %v373
    %844 = vmatprep.subr.bf16.mxu0 0
    %845 = vmatpush2.bf16.msra.mxu0 %v372
    %846 = vmatprep.subr.bf16.mxu0 0
    %847 = vmatpush2.bf16.msra.mxu0 %v371
    %848 = vmatprep.subr.bf16.mxu0 0
    %849 = vmatpush2.bf16.msra.mxu0 %v370
    %850 = vmatprep.subr.bf16.mxu0 0
    %851 = vmatpush2.bf16.msra.mxu0 %v369
    %852 = vmatprep.subr.bf16.mxu0 0
    %853 = vmatpush2.bf16.msra.mxu0 %v368
    %854 = vmatprep.subr.bf16.mxu0 0
    %855 = vmatpush2.bf16.msra.mxu0 %v367
    %856 = vmatprep.subr.bf16.mxu0 0
    %857 = vmatpush2.bf16.msra.mxu0 %v366
    %858 = vmatprep.mubr.bf16.mxu0 %v785
    %859 = vmatmul.mubr.bf16.gmra.mxu0 %v778
    %v860 = vpop.f32.mrf.mxu0
    %v861 = vadd.f32 %v821, %v860
    %v862 = vpop.f32.mrf.mxu0
    %v863 = vpop.f32.mrf.mxu0
    %v864 = vpop.f32.mrf.mxu0
    %865 = vdwg.mxu0
    %866 = vmatprep.subr.bf16.mxu0 0
    %867 = vmatpush1.bf16.msra.mxu0 %v621
    %868 = vmatprep.subr.bf16.mxu0 0
    %869 = vmatpush1.bf16.msra.mxu0 %v620
    %870 = vmatprep.subr.bf16.mxu0 0
    %871 = vmatpush1.bf16.msra.mxu0 %v619
    %872 = vmatprep.subr.bf16.mxu0 0
    %873 = vmatpush1.bf16.msra.mxu0 %v618
    %874 = vmatprep.subr.bf16.mxu0 0
    %875 = vmatpush1.bf16.msra.mxu0 %v617
    %876 = vmatprep.subr.bf16.mxu0 0
    %877 = vmatpush1.bf16.msra.mxu0 %v616
    %878 = vmatprep.subr.bf16.mxu0 0
    %879 = vmatpush1.bf16.msra.mxu0 %v615
    %880 = vmatprep.subr.bf16.mxu0 0
    %881 = vmatpush1.bf16.msra.mxu0 %v614
    %882 = vmatprep.subr.bf16.mxu0 0
    %883 = vmatpush2.bf16.msra.mxu0 %v629
    %884 = vmatprep.subr.bf16.mxu0 0
    %885 = vmatpush2.bf16.msra.mxu0 %v628
    %886 = vmatprep.subr.bf16.mxu0 0
    %887 = vmatpush2.bf16.msra.mxu0 %v627
    %888 = vmatprep.subr.bf16.mxu0 0
    %889 = vmatpush2.bf16.msra.mxu0 %v626
    %890 = vmatprep.subr.bf16.mxu0 0
    %891 = vmatpush2.bf16.msra.mxu0 %v625
    %892 = vmatprep.subr.bf16.mxu0 0
    %893 = vmatpush2.bf16.msra.mxu0 %v624
    %894 = vmatprep.subr.bf16.mxu0 0
    %895 = vmatpush2.bf16.msra.mxu0 %v623
    %896 = vmatprep.subr.bf16.mxu0 0
    %897 = vmatpush2.bf16.msra.mxu0 %v622
    %898 = vmatprep.mubr.bf16.mxu0 %v771
    %899 = vmatmul.mubr.bf16.gmra.mxu0 %v764
    %v900 = vpop.f32.mrf.mxu0
    %v901 = vadd.f32 %v861, %v900
    %v902 = vpop.f32.mrf.mxu0
    %v903 = vpop.f32.mrf.mxu0
    %v904 = vpop.f32.mrf.mxu0
    %905 = vdwg.mxu0
    %906 = vmatprep.subr.bf16.mxu0 0
    %907 = vmatpush1.bf16.msra.mxu0 %v637
    %908 = vmatprep.subr.bf16.mxu0 0
    %909 = vmatpush1.bf16.msra.mxu0 %v636
    %910 = vmatprep.subr.bf16.mxu0 0
    %911 = vmatpush1.bf16.msra.mxu0 %v635
    %912 = vmatprep.subr.bf16.mxu0 0
    %913 = vmatpush1.bf16.msra.mxu0 %v634
    %914 = vmatprep.subr.bf16.mxu0 0
    %915 = vmatpush1.bf16.msra.mxu0 %v633
    %916 = vmatprep.subr.bf16.mxu0 0
    %917 = vmatpush1.bf16.msra.mxu0 %v632
    %918 = vmatprep.subr.bf16.mxu0 0
    %919 = vmatpush1.bf16.msra.mxu0 %v631
    %920 = vmatprep.subr.bf16.mxu0 0
    %921 = vmatpush1.bf16.msra.mxu0 %v630
    %922 = vmatprep.subr.bf16.mxu0 0
    %923 = vmatpush2.bf16.msra.mxu0 %v645
    %924 = vmatprep.subr.bf16.mxu0 0
    %925 = vmatpush2.bf16.msra.mxu0 %v644
    %926 = vmatprep.subr.bf16.mxu0 0
    %927 = vmatpush2.bf16.msra.mxu0 %v643
    %928 = vmatprep.subr.bf16.mxu0 0
    %929 = vmatpush2.bf16.msra.mxu0 %v642
    %930 = vmatprep.subr.bf16.mxu0 0
    %931 = vmatpush2.bf16.msra.mxu0 %v641
    %932 = vmatprep.subr.bf16.mxu0 0
    %933 = vmatpush2.bf16.msra.mxu0 %v640
    %934 = vmatprep.subr.bf16.mxu0 0
    %935 = vmatpush2.bf16.msra.mxu0 %v639
    %936 = vmatprep.subr.bf16.mxu0 0
    %937 = vmatpush2.bf16.msra.mxu0 %v638
    %938 = vmatprep.mubr.bf16.mxu0 %v785
    %939 = vmatmul.mubr.bf16.gmra.mxu0 %v778
    %v940 = vpop.f32.mrf.mxu0
    %v941 = vadd.f32 %v901, %v940
    %v942 = vpop.f32.mrf.mxu0
    %v943 = vpop.f32.mrf.mxu0
    %v944 = vpop.f32.mrf.mxu0
    %945 = vdwg.mxu0
    %v946 = vmax.f32 %v753, %v941
    %947 = vset.pattern.permute.xlu0 2
    %948 = vperm.xlu0 %947, %v55
    %v949 = vpop.permute.xlu0 %948
    %vm950 = vcmp.eq.s32.totalorder %v949, %v185
    %v951 = vsel %vm950, 1, 0
    %v952 = vcvt.s32.f32 %v951
    %v953 = vpack.c.bf16 %v952, %v952
    %954 = vset.pattern.permute.xlu0 10
    %955 = vperm.xlu0 %954, %v55
    %v956 = vpop.permute.xlu0 %955
    %vm957 = vcmp.eq.s32.totalorder %v956, %v185
    %v958 = vsel %vm957, 1, 0
    %v959 = vcvt.s32.f32 %v958
    %v960 = vpack.c.bf16 %v959, %v959
    %961 = vset.pattern.permute.xlu0 18
    %962 = vperm.xlu0 %961, %v55
    %v963 = vpop.permute.xlu0 %962
    %vm964 = vcmp.eq.s32.totalorder %v963, %v185
    %v965 = vsel %vm964, 1, 0
    %v966 = vcvt.s32.f32 %v965
    %v967 = vpack.c.bf16 %v966, %v966
    %968 = vset.pattern.permute.xlu0 26
    %969 = vperm.xlu0 %968, %v55
    %v970 = vpop.permute.xlu0 %969
    %vm971 = vcmp.eq.s32.totalorder %v970, %v185
    %v972 = vsel %vm971, 1, 0
    %v973 = vcvt.s32.f32 %v972
    %v974 = vpack.c.bf16 %v973, %v973
    %975 = vmatprep.subr.bf16.mxu0 0
    %976 = vmatpush1.bf16.msra.mxu0 %v349
    %977 = vmatprep.subr.bf16.mxu0 0
    %978 = vmatpush1.bf16.msra.mxu0 %v348
    %979 = vmatprep.subr.bf16.mxu0 0
    %980 = vmatpush1.bf16.msra.mxu0 %v347
    %981 = vmatprep.subr.bf16.mxu0 0
    %982 = vmatpush1.bf16.msra.mxu0 %v346
    %983 = vmatprep.subr.bf16.mxu0 0
    %984 = vmatpush1.bf16.msra.mxu0 %v345
    %985 = vmatprep.subr.bf16.mxu0 0
    %986 = vmatpush1.bf16.msra.mxu0 %v344
    %987 = vmatprep.subr.bf16.mxu0 0
    %988 = vmatpush1.bf16.msra.mxu0 %v343
    %989 = vmatprep.subr.bf16.mxu0 0
    %990 = vmatpush1.bf16.msra.mxu0 %v342
    %991 = vmatprep.subr.bf16.mxu0 0
    %992 = vmatpush2.bf16.msra.mxu0 %v357
    %993 = vmatprep.subr.bf16.mxu0 0
    %994 = vmatpush2.bf16.msra.mxu0 %v356
    %995 = vmatprep.subr.bf16.mxu0 0
    %996 = vmatpush2.bf16.msra.mxu0 %v355
    %997 = vmatprep.subr.bf16.mxu0 0
    %998 = vmatpush2.bf16.msra.mxu0 %v354
    %999 = vmatprep.subr.bf16.mxu0 0
    %1000 = vmatpush2.bf16.msra.mxu0 %v353
    %1001 = vmatprep.subr.bf16.mxu0 0
    %1002 = vmatpush2.bf16.msra.mxu0 %v352
    %1003 = vmatprep.subr.bf16.mxu0 0
    %1004 = vmatpush2.bf16.msra.mxu0 %v351
    %1005 = vmatprep.subr.bf16.mxu0 0
    %1006 = vmatpush2.bf16.msra.mxu0 %v350
    %1007 = vmatprep.mubr.bf16.mxu0 %v960
    %1008 = vmatmul.mubr.bf16.gmra.mxu0 %v953
    %v1009 = vpop.f32.mrf.mxu0
    %v1010 = vadd.f32 0.0, %v1009
    %v1011 = vpop.f32.mrf.mxu0
    %v1012 = vpop.f32.mrf.mxu0
    %v1013 = vpop.f32.mrf.mxu0
    %1014 = vdwg.mxu0
    %1015 = vmatprep.subr.bf16.mxu0 0
    %1016 = vmatpush1.bf16.msra.mxu0 %v365
    %1017 = vmatprep.subr.bf16.mxu0 0
    %1018 = vmatpush1.bf16.msra.mxu0 %v364
    %1019 = vmatprep.subr.bf16.mxu0 0
    %1020 = vmatpush1.bf16.msra.mxu0 %v363
    %1021 = vmatprep.subr.bf16.mxu0 0
    %1022 = vmatpush1.bf16.msra.mxu0 %v362
    %1023 = vmatprep.subr.bf16.mxu0 0
    %1024 = vmatpush1.bf16.msra.mxu0 %v361
    %1025 = vmatprep.subr.bf16.mxu0 0
    %1026 = vmatpush1.bf16.msra.mxu0 %v360
    %1027 = vmatprep.subr.bf16.mxu0 0
    %1028 = vmatpush1.bf16.msra.mxu0 %v359
    %1029 = vmatprep.subr.bf16.mxu0 0
    %1030 = vmatpush1.bf16.msra.mxu0 %v358
    %1031 = vmatprep.subr.bf16.mxu0 0
    %1032 = vmatpush2.bf16.msra.mxu0 %v373
    %1033 = vmatprep.subr.bf16.mxu0 0
    %1034 = vmatpush2.bf16.msra.mxu0 %v372
    %1035 = vmatprep.subr.bf16.mxu0 0
    %1036 = vmatpush2.bf16.msra.mxu0 %v371
    %1037 = vmatprep.subr.bf16.mxu0 0
    %1038 = vmatpush2.bf16.msra.mxu0 %v370
    %1039 = vmatprep.subr.bf16.mxu0 0
    %1040 = vmatpush2.bf16.msra.mxu0 %v369
    %1041 = vmatprep.subr.bf16.mxu0 0
    %1042 = vmatpush2.bf16.msra.mxu0 %v368
    %1043 = vmatprep.subr.bf16.mxu0 0
    %1044 = vmatpush2.bf16.msra.mxu0 %v367
    %1045 = vmatprep.subr.bf16.mxu0 0
    %1046 = vmatpush2.bf16.msra.mxu0 %v366
    %1047 = vmatprep.mubr.bf16.mxu0 %v974
    %1048 = vmatmul.mubr.bf16.gmra.mxu0 %v967
    %v1049 = vpop.f32.mrf.mxu0
    %v1050 = vadd.f32 %v1010, %v1049
    %v1051 = vpop.f32.mrf.mxu0
    %v1052 = vpop.f32.mrf.mxu0
    %v1053 = vpop.f32.mrf.mxu0
    %1054 = vdwg.mxu0
    %1055 = vmatprep.subr.bf16.mxu0 0
    %1056 = vmatpush1.bf16.msra.mxu0 %v621
    %1057 = vmatprep.subr.bf16.mxu0 0
    %1058 = vmatpush1.bf16.msra.mxu0 %v620
    %1059 = vmatprep.subr.bf16.mxu0 0
    %1060 = vmatpush1.bf16.msra.mxu0 %v619
    %1061 = vmatprep.subr.bf16.mxu0 0
    %1062 = vmatpush1.bf16.msra.mxu0 %v618
    %1063 = vmatprep.subr.bf16.mxu0 0
    %1064 = vmatpush1.bf16.msra.mxu0 %v617
    %1065 = vmatprep.subr.bf16.mxu0 0
    %1066 = vmatpush1.bf16.msra.mxu0 %v616
    %1067 = vmatprep.subr.bf16.mxu0 0
    %1068 = vmatpush1.bf16.msra.mxu0 %v615
    %1069 = vmatprep.subr.bf16.mxu0 0
    %1070 = vmatpush1.bf16.msra.mxu0 %v614
    %1071 = vmatprep.subr.bf16.mxu0 0
    %1072 = vmatpush2.bf16.msra.mxu0 %v629
    %1073 = vmatprep.subr.bf16.mxu0 0
    %1074 = vmatpush2.bf16.msra.mxu0 %v628
    %1075 = vmatprep.subr.bf16.mxu0 0
    %1076 = vmatpush2.bf16.msra.mxu0 %v627
    %1077 = vmatprep.subr.bf16.mxu0 0
    %1078 = vmatpush2.bf16.msra.mxu0 %v626
    %1079 = vmatprep.subr.bf16.mxu0 0
    %1080 = vmatpush2.bf16.msra.mxu0 %v625
    %1081 = vmatprep.subr.bf16.mxu0 0
    %1082 = vmatpush2.bf16.msra.mxu0 %v624
    %1083 = vmatprep.subr.bf16.mxu0 0
    %1084 = vmatpush2.bf16.msra.mxu0 %v623
    %1085 = vmatprep.subr.bf16.mxu0 0
    %1086 = vmatpush2.bf16.msra.mxu0 %v622
    %1087 = vmatprep.mubr.bf16.mxu0 %v960
    %1088 = vmatmul.mubr.bf16.gmra.mxu0 %v953
    %v1089 = vpop.f32.mrf.mxu0
    %v1090 = vadd.f32 %v1050, %v1089
    %v1091 = vpop.f32.mrf.mxu0
    %v1092 = vpop.f32.mrf.mxu0
    %v1093 = vpop.f32.mrf.mxu0
    %1094 = vdwg.mxu0
    %1095 = vmatprep.subr.bf16.mxu0 0
    %1096 = vmatpush1.bf16.msra.mxu0 %v637
    %1097 = vmatprep.subr.bf16.mxu0 0
    %1098 = vmatpush1.bf16.msra.mxu0 %v636
    %1099 = vmatprep.subr.bf16.mxu0 0
    %1100 = vmatpush1.bf16.msra.mxu0 %v635
    %1101 = vmatprep.subr.bf16.mxu0 0
    %1102 = vmatpush1.bf16.msra.mxu0 %v634
    %1103 = vmatprep.subr.bf16.mxu0 0
    %1104 = vmatpush1.bf16.msra.mxu0 %v633
    %1105 = vmatprep.subr.bf16.mxu0 0
    %1106 = vmatpush1.bf16.msra.mxu0 %v632
    %1107 = vmatprep.subr.bf16.mxu0 0
    %1108 = vmatpush1.bf16.msra.mxu0 %v631
    %1109 = vmatprep.subr.bf16.mxu0 0
    %1110 = vmatpush1.bf16.msra.mxu0 %v630
    %1111 = vmatprep.subr.bf16.mxu0 0
    %1112 = vmatpush2.bf16.msra.mxu0 %v645
    %1113 = vmatprep.subr.bf16.mxu0 0
    %1114 = vmatpush2.bf16.msra.mxu0 %v644
    %1115 = vmatprep.subr.bf16.mxu0 0
    %1116 = vmatpush2.bf16.msra.mxu0 %v643
    %1117 = vmatprep.subr.bf16.mxu0 0
    %1118 = vmatpush2.bf16.msra.mxu0 %v642
    %1119 = vmatprep.subr.bf16.mxu0 0
    %1120 = vmatpush2.bf16.msra.mxu0 %v641
    %1121 = vmatprep.subr.bf16.mxu0 0
    %1122 = vmatpush2.bf16.msra.mxu0 %v640
    %1123 = vmatprep.subr.bf16.mxu0 0
    %1124 = vmatpush2.bf16.msra.mxu0 %v639
    %1125 = vmatprep.subr.bf16.mxu0 0
    %1126 = vmatpush2.bf16.msra.mxu0 %v638
    %1127 = vmatprep.mubr.bf16.mxu0 %v974
    %1128 = vmatmul.mubr.bf16.gmra.mxu0 %v967
    %v1129 = vpop.f32.mrf.mxu0
    %v1130 = vadd.f32 %v1090, %v1129
    %v1131 = vpop.f32.mrf.mxu0
    %v1132 = vpop.f32.mrf.mxu0
    %v1133 = vpop.f32.mrf.mxu0
    %1134 = vdwg.mxu0
    %v1135 = vmax.f32 %v946, %v1130
    %1136 = vset.pattern.permute.xlu0 3
    %1137 = vperm.xlu0 %1136, %v55
    %v1138 = vpop.permute.xlu0 %1137
    %vm1139 = vcmp.eq.s32.totalorder %v1138, %v185
    %v1140 = vsel %vm1139, 1, 0
    %v1141 = vcvt.s32.f32 %v1140
    %v1142 = vpack.c.bf16 %v1141, %v1141
    %1143 = vset.pattern.permute.xlu0 11
    %1144 = vperm.xlu0 %1143, %v55
    %v1145 = vpop.permute.xlu0 %1144
    %vm1146 = vcmp.eq.s32.totalorder %v1145, %v185
    %v1147 = vsel %vm1146, 1, 0
    %v1148 = vcvt.s32.f32 %v1147
    %v1149 = vpack.c.bf16 %v1148, %v1148
    %1150 = vset.pattern.permute.xlu0 19
    %1151 = vperm.xlu0 %1150, %v55
    %v1152 = vpop.permute.xlu0 %1151
    %vm1153 = vcmp.eq.s32.totalorder %v1152, %v185
    %v1154 = vsel %vm1153, 1, 0
    %v1155 = vcvt.s32.f32 %v1154
    %v1156 = vpack.c.bf16 %v1155, %v1155
    %1157 = vset.pattern.permute.xlu0 27
    %1158 = vperm.xlu0 %1157, %v55
    %v1159 = vpop.permute.xlu0 %1158
    %vm1160 = vcmp.eq.s32.totalorder %v1159, %v185
    %v1161 = vsel %vm1160, 1, 0
    %v1162 = vcvt.s32.f32 %v1161
    %v1163 = vpack.c.bf16 %v1162, %v1162
    %1164 = vmatprep.subr.bf16.mxu0 0
    %1165 = vmatpush1.bf16.msra.mxu0 %v349
    %1166 = vmatprep.subr.bf16.mxu0 0
    %1167 = vmatpush1.bf16.msra.mxu0 %v348
    %1168 = vmatprep.subr.bf16.mxu0 0
    %1169 = vmatpush1.bf16.msra.mxu0 %v347
    %1170 = vmatprep.subr.bf16.mxu0 0
    %1171 = vmatpush1.bf16.msra.mxu0 %v346
    %1172 = vmatprep.subr.bf16.mxu0 0
    %1173 = vmatpush1.bf16.msra.mxu0 %v345
    %1174 = vmatprep.subr.bf16.mxu0 0
    %1175 = vmatpush1.bf16.msra.mxu0 %v344
    %1176 = vmatprep.subr.bf16.mxu0 0
    %1177 = vmatpush1.bf16.msra.mxu0 %v343
    %1178 = vmatprep.subr.bf16.mxu0 0
    %1179 = vmatpush1.bf16.msra.mxu0 %v342
    %1180 = vmatprep.subr.bf16.mxu0 0
    %1181 = vmatpush2.bf16.msra.mxu0 %v357
    %1182 = vmatprep.subr.bf16.mxu0 0
    %1183 = vmatpush2.bf16.msra.mxu0 %v356
    %1184 = vmatprep.subr.bf16.mxu0 0
    %1185 = vmatpush2.bf16.msra.mxu0 %v355
    %1186 = vmatprep.subr.bf16.mxu0 0
    %1187 = vmatpush2.bf16.msra.mxu0 %v354
    %1188 = vmatprep.subr.bf16.mxu0 0
    %1189 = vmatpush2.bf16.msra.mxu0 %v353
    %1190 = vmatprep.subr.bf16.mxu0 0
    %1191 = vmatpush2.bf16.msra.mxu0 %v352
    %1192 = vmatprep.subr.bf16.mxu0 0
    %1193 = vmatpush2.bf16.msra.mxu0 %v351
    %1194 = vmatprep.subr.bf16.mxu0 0
    %1195 = vmatpush2.bf16.msra.mxu0 %v350
    %1196 = vmatprep.mubr.bf16.mxu0 %v1149
    %1197 = vmatmul.mubr.bf16.gmra.mxu0 %v1142
    %v1198 = vpop.f32.mrf.mxu0
    %v1199 = vadd.f32 0.0, %v1198
    %v1200 = vpop.f32.mrf.mxu0
    %v1201 = vpop.f32.mrf.mxu0
    %v1202 = vpop.f32.mrf.mxu0
    %1203 = vdwg.mxu0
    %1204 = vmatprep.subr.bf16.mxu0 0
    %1205 = vmatpush1.bf16.msra.mxu0 %v365
    %1206 = vmatprep.subr.bf16.mxu0 0
    %1207 = vmatpush1.bf16.msra.mxu0 %v364
    %1208 = vmatprep.subr.bf16.mxu0 0
    %1209 = vmatpush1.bf16.msra.mxu0 %v363
    %1210 = vmatprep.subr.bf16.mxu0 0
    %1211 = vmatpush1.bf16.msra.mxu0 %v362
    %1212 = vmatprep.subr.bf16.mxu0 0
    %1213 = vmatpush1.bf16.msra.mxu0 %v361
    %1214 = vmatprep.subr.bf16.mxu0 0
    %1215 = vmatpush1.bf16.msra.mxu0 %v360
    %1216 = vmatprep.subr.bf16.mxu0 0
    %1217 = vmatpush1.bf16.msra.mxu0 %v359
    %1218 = vmatprep.subr.bf16.mxu0 0
    %1219 = vmatpush1.bf16.msra.mxu0 %v358
    %1220 = vmatprep.subr.bf16.mxu0 0
    %1221 = vmatpush2.bf16.msra.mxu0 %v373
    %1222 = vmatprep.subr.bf16.mxu0 0
    %1223 = vmatpush2.bf16.msra.mxu0 %v372
    %1224 = vmatprep.subr.bf16.mxu0 0
    %1225 = vmatpush2.bf16.msra.mxu0 %v371
    %1226 = vmatprep.subr.bf16.mxu0 0
    %1227 = vmatpush2.bf16.msra.mxu0 %v370
    %1228 = vmatprep.subr.bf16.mxu0 0
    %1229 = vmatpush2.bf16.msra.mxu0 %v369
    %1230 = vmatprep.subr.bf16.mxu0 0
    %1231 = vmatpush2.bf16.msra.mxu0 %v368
    %1232 = vmatprep.subr.bf16.mxu0 0
    %1233 = vmatpush2.bf16.msra.mxu0 %v367
    %1234 = vmatprep.subr.bf16.mxu0 0
    %1235 = vmatpush2.bf16.msra.mxu0 %v366
    %1236 = vmatprep.mubr.bf16.mxu0 %v1163
    %1237 = vmatmul.mubr.bf16.gmra.mxu0 %v1156
    %v1238 = vpop.f32.mrf.mxu0
    %v1239 = vadd.f32 %v1199, %v1238
    %v1240 = vpop.f32.mrf.mxu0
    %v1241 = vpop.f32.mrf.mxu0
    %v1242 = vpop.f32.mrf.mxu0
    %1243 = vdwg.mxu0
    %1244 = vmatprep.subr.bf16.mxu0 0
    %1245 = vmatpush1.bf16.msra.mxu0 %v621
    %1246 = vmatprep.subr.bf16.mxu0 0
    %1247 = vmatpush1.bf16.msra.mxu0 %v620
    %1248 = vmatprep.subr.bf16.mxu0 0
    %1249 = vmatpush1.bf16.msra.mxu0 %v619
    %1250 = vmatprep.subr.bf16.mxu0 0
    %1251 = vmatpush1.bf16.msra.mxu0 %v618
    %1252 = vmatprep.subr.bf16.mxu0 0
    %1253 = vmatpush1.bf16.msra.mxu0 %v617
    %1254 = vmatprep.subr.bf16.mxu0 0
    %1255 = vmatpush1.bf16.msra.mxu0 %v616
    %1256 = vmatprep.subr.bf16.mxu0 0
    %1257 = vmatpush1.bf16.msra.mxu0 %v615
    %1258 = vmatprep.subr.bf16.mxu0 0
    %1259 = vmatpush1.bf16.msra.mxu0 %v614
    %1260 = vmatprep.subr.bf16.mxu0 0
    %1261 = vmatpush2.bf16.msra.mxu0 %v629
    %1262 = vmatprep.subr.bf16.mxu0 0
    %1263 = vmatpush2.bf16.msra.mxu0 %v628
    %1264 = vmatprep.subr.bf16.mxu0 0
    %1265 = vmatpush2.bf16.msra.mxu0 %v627
    %1266 = vmatprep.subr.bf16.mxu0 0
    %1267 = vmatpush2.bf16.msra.mxu0 %v626
    %1268 = vmatprep.subr.bf16.mxu0 0
    %1269 = vmatpush2.bf16.msra.mxu0 %v625
    %1270 = vmatprep.subr.bf16.mxu0 0
    %1271 = vmatpush2.bf16.msra.mxu0 %v624
    %1272 = vmatprep.subr.bf16.mxu0 0
    %1273 = vmatpush2.bf16.msra.mxu0 %v623
    %1274 = vmatprep.subr.bf16.mxu0 0
    %1275 = vmatpush2.bf16.msra.mxu0 %v622
    %1276 = vmatprep.mubr.bf16.mxu0 %v1149
    %1277 = vmatmul.mubr.bf16.gmra.mxu0 %v1142
    %v1278 = vpop.f32.mrf.mxu0
    %v1279 = vadd.f32 %v1239, %v1278
    %v1280 = vpop.f32.mrf.mxu0
    %v1281 = vpop.f32.mrf.mxu0
    %v1282 = vpop.f32.mrf.mxu0
    %1283 = vdwg.mxu0
    %1284 = vmatprep.subr.bf16.mxu0 0
    %1285 = vmatpush1.bf16.msra.mxu0 %v637
    %1286 = vmatprep.subr.bf16.mxu0 0
    %1287 = vmatpush1.bf16.msra.mxu0 %v636
    %1288 = vmatprep.subr.bf16.mxu0 0
    %1289 = vmatpush1.bf16.msra.mxu0 %v635
    %1290 = vmatprep.subr.bf16.mxu0 0
    %1291 = vmatpush1.bf16.msra.mxu0 %v634
    %1292 = vmatprep.subr.bf16.mxu0 0
    %1293 = vmatpush1.bf16.msra.mxu0 %v633
    %1294 = vmatprep.subr.bf16.mxu0 0
    %1295 = vmatpush1.bf16.msra.mxu0 %v632
    %1296 = vmatprep.subr.bf16.mxu0 0
    %1297 = vmatpush1.bf16.msra.mxu0 %v631
    %1298 = vmatprep.subr.bf16.mxu0 0
    %1299 = vmatpush1.bf16.msra.mxu0 %v630
    %1300 = vmatprep.subr.bf16.mxu0 0
    %1301 = vmatpush2.bf16.msra.mxu0 %v645
    %1302 = vmatprep.subr.bf16.mxu0 0
    %1303 = vmatpush2.bf16.msra.mxu0 %v644
    %1304 = vmatprep.subr.bf16.mxu0 0
    %1305 = vmatpush2.bf16.msra.mxu0 %v643
    %1306 = vmatprep.subr.bf16.mxu0 0
    %1307 = vmatpush2.bf16.msra.mxu0 %v642
    %1308 = vmatprep.subr.bf16.mxu0 0
    %1309 = vmatpush2.bf16.msra.mxu0 %v641
    %1310 = vmatprep.subr.bf16.mxu0 0
    %1311 = vmatpush2.bf16.msra.mxu0 %v640
    %1312 = vmatprep.subr.bf16.mxu0 0
    %1313 = vmatpush2.bf16.msra.mxu0 %v639
    %1314 = vmatprep.subr.bf16.mxu0 0
    %1315 = vmatpush2.bf16.msra.mxu0 %v638
    %1316 = vmatprep.mubr.bf16.mxu0 %v1163
    %1317 = vmatmul.mubr.bf16.gmra.mxu0 %v1156
    %v1318 = vpop.f32.mrf.mxu0
    %v1319 = vadd.f32 %v1279, %v1318
    %v1320 = vpop.f32.mrf.mxu0
    %v1321 = vpop.f32.mrf.mxu0
    %v1322 = vpop.f32.mrf.mxu0
    %1323 = vdwg.mxu0
    %v1324 = vmax.f32 %v1135, %v1319
    %1325 = vset.pattern.permute.xlu0 4
    %1326 = vperm.xlu0 %1325, %v55
    %v1327 = vpop.permute.xlu0 %1326
    %vm1328 = vcmp.eq.s32.totalorder %v1327, %v185
    %v1329 = vsel %vm1328, 1, 0
    %v1330 = vcvt.s32.f32 %v1329
    %v1331 = vpack.c.bf16 %v1330, %v1330
    %1332 = vset.pattern.permute.xlu0 12
    %1333 = vperm.xlu0 %1332, %v55
    %v1334 = vpop.permute.xlu0 %1333
    %vm1335 = vcmp.eq.s32.totalorder %v1334, %v185
    %v1336 = vsel %vm1335, 1, 0
    %v1337 = vcvt.s32.f32 %v1336
    %v1338 = vpack.c.bf16 %v1337, %v1337
    %1339 = vset.pattern.permute.xlu0 20
    %1340 = vperm.xlu0 %1339, %v55
    %v1341 = vpop.permute.xlu0 %1340
    %vm1342 = vcmp.eq.s32.totalorder %v1341, %v185
    %v1343 = vsel %vm1342, 1, 0
    %v1344 = vcvt.s32.f32 %v1343
    %v1345 = vpack.c.bf16 %v1344, %v1344
    %1346 = vset.pattern.permute.xlu0 28
    %1347 = vperm.xlu0 %1346, %v55
    %v1348 = vpop.permute.xlu0 %1347
    %vm1349 = vcmp.eq.s32.totalorder %v1348, %v185
    %v1350 = vsel %vm1349, 1, 0
    %v1351 = vcvt.s32.f32 %v1350
    %v1352 = vpack.c.bf16 %v1351, %v1351
    %1353 = vmatprep.subr.bf16.mxu0 0
    %1354 = vmatpush1.bf16.msra.mxu0 %v349
    %1355 = vmatprep.subr.bf16.mxu0 0
    %1356 = vmatpush1.bf16.msra.mxu0 %v348
    %1357 = vmatprep.subr.bf16.mxu0 0
    %1358 = vmatpush1.bf16.msra.mxu0 %v347
    %1359 = vmatprep.subr.bf16.mxu0 0
    %1360 = vmatpush1.bf16.msra.mxu0 %v346
    %1361 = vmatprep.subr.bf16.mxu0 0
    %1362 = vmatpush1.bf16.msra.mxu0 %v345
    %1363 = vmatprep.subr.bf16.mxu0 0
    %1364 = vmatpush1.bf16.msra.mxu0 %v344
    %1365 = vmatprep.subr.bf16.mxu0 0
    %1366 = vmatpush1.bf16.msra.mxu0 %v343
    %1367 = vmatprep.subr.bf16.mxu0 0
    %1368 = vmatpush1.bf16.msra.mxu0 %v342
    %1369 = vmatprep.subr.bf16.mxu0 0
    %1370 = vmatpush2.bf16.msra.mxu0 %v357
    %1371 = vmatprep.subr.bf16.mxu0 0
    %1372 = vmatpush2.bf16.msra.mxu0 %v356
    %1373 = vmatprep.subr.bf16.mxu0 0
    %1374 = vmatpush2.bf16.msra.mxu0 %v355
    %1375 = vmatprep.subr.bf16.mxu0 0
    %1376 = vmatpush2.bf16.msra.mxu0 %v354
    %1377 = vmatprep.subr.bf16.mxu0 0
    %1378 = vmatpush2.bf16.msra.mxu0 %v353
    %1379 = vmatprep.subr.bf16.mxu0 0
    %1380 = vmatpush2.bf16.msra.mxu0 %v352
    %1381 = vmatprep.subr.bf16.mxu0 0
    %1382 = vmatpush2.bf16.msra.mxu0 %v351
    %1383 = vmatprep.subr.bf16.mxu0 0
    %1384 = vmatpush2.bf16.msra.mxu0 %v350
    %1385 = vmatprep.mubr.bf16.mxu0 %v1338
    %1386 = vmatmul.mubr.bf16.gmra.mxu0 %v1331
    %v1387 = vpop.f32.mrf.mxu0
    %v1388 = vadd.f32 0.0, %v1387
    %v1389 = vpop.f32.mrf.mxu0
    %v1390 = vpop.f32.mrf.mxu0
    %v1391 = vpop.f32.mrf.mxu0
    %1392 = vdwg.mxu0
    %1393 = vmatprep.subr.bf16.mxu0 0
    %1394 = vmatpush1.bf16.msra.mxu0 %v365
    %1395 = vmatprep.subr.bf16.mxu0 0
    %1396 = vmatpush1.bf16.msra.mxu0 %v364
    %1397 = vmatprep.subr.bf16.mxu0 0
    %1398 = vmatpush1.bf16.msra.mxu0 %v363
    %1399 = vmatprep.subr.bf16.mxu0 0
    %1400 = vmatpush1.bf16.msra.mxu0 %v362
    %1401 = vmatprep.subr.bf16.mxu0 0
    %1402 = vmatpush1.bf16.msra.mxu0 %v361
    %1403 = vmatprep.subr.bf16.mxu0 0
    %1404 = vmatpush1.bf16.msra.mxu0 %v360
    %1405 = vmatprep.subr.bf16.mxu0 0
    %1406 = vmatpush1.bf16.msra.mxu0 %v359
    %1407 = vmatprep.subr.bf16.mxu0 0
    %1408 = vmatpush1.bf16.msra.mxu0 %v358
    %1409 = vmatprep.subr.bf16.mxu0 0
    %1410 = vmatpush2.bf16.msra.mxu0 %v373
    %1411 = vmatprep.subr.bf16.mxu0 0
    %1412 = vmatpush2.bf16.msra.mxu0 %v372
    %1413 = vmatprep.subr.bf16.mxu0 0
    %1414 = vmatpush2.bf16.msra.mxu0 %v371
    %1415 = vmatprep.subr.bf16.mxu0 0
    %1416 = vmatpush2.bf16.msra.mxu0 %v370
    %1417 = vmatprep.subr.bf16.mxu0 0
    %1418 = vmatpush2.bf16.msra.mxu0 %v369
    %1419 = vmatprep.subr.bf16.mxu0 0
    %1420 = vmatpush2.bf16.msra.mxu0 %v368
    %1421 = vmatprep.subr.bf16.mxu0 0
    %1422 = vmatpush2.bf16.msra.mxu0 %v367
    %1423 = vmatprep.subr.bf16.mxu0 0
    %1424 = vmatpush2.bf16.msra.mxu0 %v366
    %1425 = vmatprep.mubr.bf16.mxu0 %v1352
    %1426 = vmatmul.mubr.bf16.gmra.mxu0 %v1345
    %v1427 = vpop.f32.mrf.mxu0
    %v1428 = vadd.f32 %v1388, %v1427
    %v1429 = vpop.f32.mrf.mxu0
    %v1430 = vpop.f32.mrf.mxu0
    %v1431 = vpop.f32.mrf.mxu0
    %1432 = vdwg.mxu0
    %1433 = vmatprep.subr.bf16.mxu0 0
    %1434 = vmatpush1.bf16.msra.mxu0 %v621
    %1435 = vmatprep.subr.bf16.mxu0 0
    %1436 = vmatpush1.bf16.msra.mxu0 %v620
    %1437 = vmatprep.subr.bf16.mxu0 0
    %1438 = vmatpush1.bf16.msra.mxu0 %v619
    %1439 = vmatprep.subr.bf16.mxu0 0
    %1440 = vmatpush1.bf16.msra.mxu0 %v618
    %1441 = vmatprep.subr.bf16.mxu0 0
    %1442 = vmatpush1.bf16.msra.mxu0 %v617
    %1443 = vmatprep.subr.bf16.mxu0 0
    %1444 = vmatpush1.bf16.msra.mxu0 %v616
    %1445 = vmatprep.subr.bf16.mxu0 0
    %1446 = vmatpush1.bf16.msra.mxu0 %v615
    %1447 = vmatprep.subr.bf16.mxu0 0
    %1448 = vmatpush1.bf16.msra.mxu0 %v614
    %1449 = vmatprep.subr.bf16.mxu0 0
    %1450 = vmatpush2.bf16.msra.mxu0 %v629
    %1451 = vmatprep.subr.bf16.mxu0 0
    %1452 = vmatpush2.bf16.msra.mxu0 %v628
    %1453 = vmatprep.subr.bf16.mxu0 0
    %1454 = vmatpush2.bf16.msra.mxu0 %v627
    %1455 = vmatprep.subr.bf16.mxu0 0
    %1456 = vmatpush2.bf16.msra.mxu0 %v626
    %1457 = vmatprep.subr.bf16.mxu0 0
    %1458 = vmatpush2.bf16.msra.mxu0 %v625
    %1459 = vmatprep.subr.bf16.mxu0 0
    %1460 = vmatpush2.bf16.msra.mxu0 %v624
    %1461 = vmatprep.subr.bf16.mxu0 0
    %1462 = vmatpush2.bf16.msra.mxu0 %v623
    %1463 = vmatprep.subr.bf16.mxu0 0
    %1464 = vmatpush2.bf16.msra.mxu0 %v622
    %1465 = vmatprep.mubr.bf16.mxu0 %v1338
    %1466 = vmatmul.mubr.bf16.gmra.mxu0 %v1331
    %v1467 = vpop.f32.mrf.mxu0
    %v1468 = vadd.f32 %v1428, %v1467
    %v1469 = vpop.f32.mrf.mxu0
    %v1470 = vpop.f32.mrf.mxu0
    %v1471 = vpop.f32.mrf.mxu0
    %1472 = vdwg.mxu0
    %1473 = vmatprep.subr.bf16.mxu0 0
    %1474 = vmatpush1.bf16.msra.mxu0 %v637
    %1475 = vmatprep.subr.bf16.mxu0 0
    %1476 = vmatpush1.bf16.msra.mxu0 %v636
    %1477 = vmatprep.subr.bf16.mxu0 0
    %1478 = vmatpush1.bf16.msra.mxu0 %v635
    %1479 = vmatprep.subr.bf16.mxu0 0
    %1480 = vmatpush1.bf16.msra.mxu0 %v634
    %1481 = vmatprep.subr.bf16.mxu0 0
    %1482 = vmatpush1.bf16.msra.mxu0 %v633
    %1483 = vmatprep.subr.bf16.mxu0 0
    %1484 = vmatpush1.bf16.msra.mxu0 %v632
    %1485 = vmatprep.subr.bf16.mxu0 0
    %1486 = vmatpush1.bf16.msra.mxu0 %v631
    %1487 = vmatprep.subr.bf16.mxu0 0
    %1488 = vmatpush1.bf16.msra.mxu0 %v630
    %1489 = vmatprep.subr.bf16.mxu0 0
    %1490 = vmatpush2.bf16.msra.mxu0 %v645
    %1491 = vmatprep.subr.bf16.mxu0 0
    %1492 = vmatpush2.bf16.msra.mxu0 %v644
    %1493 = vmatprep.subr.bf16.mxu0 0
    %1494 = vmatpush2.bf16.msra.mxu0 %v643
    %1495 = vmatprep.subr.bf16.mxu0 0
    %1496 = vmatpush2.bf16.msra.mxu0 %v642
    %1497 = vmatprep.subr.bf16.mxu0 0
    %1498 = vmatpush2.bf16.msra.mxu0 %v641
    %1499 = vmatprep.subr.bf16.mxu0 0
    %1500 = vmatpush2.bf16.msra.mxu0 %v640
    %1501 = vmatprep.subr.bf16.mxu0 0
    %1502 = vmatpush2.bf16.msra.mxu0 %v639
    %1503 = vmatprep.subr.bf16.mxu0 0
    %1504 = vmatpush2.bf16.msra.mxu0 %v638
    %1505 = vmatprep.mubr.bf16.mxu0 %v1352
    %1506 = vmatmul.mubr.bf16.gmra.mxu0 %v1345
    %v1507 = vpop.f32.mrf.mxu0
    %v1508 = vadd.f32 %v1468, %v1507
    %v1509 = vpop.f32.mrf.mxu0
    %v1510 = vpop.f32.mrf.mxu0
    %v1511 = vpop.f32.mrf.mxu0
    %1512 = vdwg.mxu0
    %v1513 = vmax.f32 %v1324, %v1508
    %1514 = vset.pattern.permute.xlu0 5
    %1515 = vperm.xlu0 %1514, %v55
    %v1516 = vpop.permute.xlu0 %1515
    %vm1517 = vcmp.eq.s32.totalorder %v1516, %v185
    %v1518 = vsel %vm1517, 1, 0
    %v1519 = vcvt.s32.f32 %v1518
    %v1520 = vpack.c.bf16 %v1519, %v1519
    %1521 = vset.pattern.permute.xlu0 13
    %1522 = vperm.xlu0 %1521, %v55
    %v1523 = vpop.permute.xlu0 %1522
    %vm1524 = vcmp.eq.s32.totalorder %v1523, %v185
    %v1525 = vsel %vm1524, 1, 0
    %v1526 = vcvt.s32.f32 %v1525
    %v1527 = vpack.c.bf16 %v1526, %v1526
    %1528 = vset.pattern.permute.xlu0 21
    %1529 = vperm.xlu0 %1528, %v55
    %v1530 = vpop.permute.xlu0 %1529
    %vm1531 = vcmp.eq.s32.totalorder %v1530, %v185
    %v1532 = vsel %vm1531, 1, 0
    %v1533 = vcvt.s32.f32 %v1532
    %v1534 = vpack.c.bf16 %v1533, %v1533
    %1535 = vset.pattern.permute.xlu0 29
    %1536 = vperm.xlu0 %1535, %v55
    %v1537 = vpop.permute.xlu0 %1536
    %vm1538 = vcmp.eq.s32.totalorder %v1537, %v185
    %v1539 = vsel %vm1538, 1, 0
    %v1540 = vcvt.s32.f32 %v1539
    %v1541 = vpack.c.bf16 %v1540, %v1540
    %1542 = vmatprep.subr.bf16.mxu0 0
    %1543 = vmatpush1.bf16.msra.mxu0 %v349
    %1544 = vmatprep.subr.bf16.mxu0 0
    %1545 = vmatpush1.bf16.msra.mxu0 %v348
    %1546 = vmatprep.subr.bf16.mxu0 0
    %1547 = vmatpush1.bf16.msra.mxu0 %v347
    %1548 = vmatprep.subr.bf16.mxu0 0
    %1549 = vmatpush1.bf16.msra.mxu0 %v346
    %1550 = vmatprep.subr.bf16.mxu0 0
    %1551 = vmatpush1.bf16.msra.mxu0 %v345
    %1552 = vmatprep.subr.bf16.mxu0 0
    %1553 = vmatpush1.bf16.msra.mxu0 %v344
    %1554 = vmatprep.subr.bf16.mxu0 0
    %1555 = vmatpush1.bf16.msra.mxu0 %v343
    %1556 = vmatprep.subr.bf16.mxu0 0
    %1557 = vmatpush1.bf16.msra.mxu0 %v342
    %1558 = vmatprep.subr.bf16.mxu0 0
    %1559 = vmatpush2.bf16.msra.mxu0 %v357
    %1560 = vmatprep.subr.bf16.mxu0 0
    %1561 = vmatpush2.bf16.msra.mxu0 %v356
    %1562 = vmatprep.subr.bf16.mxu0 0
    %1563 = vmatpush2.bf16.msra.mxu0 %v355
    %1564 = vmatprep.subr.bf16.mxu0 0
    %1565 = vmatpush2.bf16.msra.mxu0 %v354
    %1566 = vmatprep.subr.bf16.mxu0 0
    %1567 = vmatpush2.bf16.msra.mxu0 %v353
    %1568 = vmatprep.subr.bf16.mxu0 0
    %1569 = vmatpush2.bf16.msra.mxu0 %v352
    %1570 = vmatprep.subr.bf16.mxu0 0
    %1571 = vmatpush2.bf16.msra.mxu0 %v351
    %1572 = vmatprep.subr.bf16.mxu0 0
    %1573 = vmatpush2.bf16.msra.mxu0 %v350
    %1574 = vmatprep.mubr.bf16.mxu0 %v1527
    %1575 = vmatmul.mubr.bf16.gmra.mxu0 %v1520
    %v1576 = vpop.f32.mrf.mxu0
    %v1577 = vadd.f32 0.0, %v1576
    %v1578 = vpop.f32.mrf.mxu0
    %v1579 = vpop.f32.mrf.mxu0
    %v1580 = vpop.f32.mrf.mxu0
    %1581 = vdwg.mxu0
    %1582 = vmatprep.subr.bf16.mxu0 0
    %1583 = vmatpush1.bf16.msra.mxu0 %v365
    %1584 = vmatprep.subr.bf16.mxu0 0
    %1585 = vmatpush1.bf16.msra.mxu0 %v364
    %1586 = vmatprep.subr.bf16.mxu0 0
    %1587 = vmatpush1.bf16.msra.mxu0 %v363
    %1588 = vmatprep.subr.bf16.mxu0 0
    %1589 = vmatpush1.bf16.msra.mxu0 %v362
    %1590 = vmatprep.subr.bf16.mxu0 0
    %1591 = vmatpush1.bf16.msra.mxu0 %v361
    %1592 = vmatprep.subr.bf16.mxu0 0
    %1593 = vmatpush1.bf16.msra.mxu0 %v360
    %1594 = vmatprep.subr.bf16.mxu0 0
    %1595 = vmatpush1.bf16.msra.mxu0 %v359
    %1596 = vmatprep.subr.bf16.mxu0 0
    %1597 = vmatpush1.bf16.msra.mxu0 %v358
    %1598 = vmatprep.subr.bf16.mxu0 0
    %1599 = vmatpush2.bf16.msra.mxu0 %v373
    %1600 = vmatprep.subr.bf16.mxu0 0
    %1601 = vmatpush2.bf16.msra.mxu0 %v372
    %1602 = vmatprep.subr.bf16.mxu0 0
    %1603 = vmatpush2.bf16.msra.mxu0 %v371
    %1604 = vmatprep.subr.bf16.mxu0 0
    %1605 = vmatpush2.bf16.msra.mxu0 %v370
    %1606 = vmatprep.subr.bf16.mxu0 0
    %1607 = vmatpush2.bf16.msra.mxu0 %v369
    %1608 = vmatprep.subr.bf16.mxu0 0
    %1609 = vmatpush2.bf16.msra.mxu0 %v368
    %1610 = vmatprep.subr.bf16.mxu0 0
    %1611 = vmatpush2.bf16.msra.mxu0 %v367
    %1612 = vmatprep.subr.bf16.mxu0 0
    %1613 = vmatpush2.bf16.msra.mxu0 %v366
    %1614 = vmatprep.mubr.bf16.mxu0 %v1541
    %1615 = vmatmul.mubr.bf16.gmra.mxu0 %v1534
    %v1616 = vpop.f32.mrf.mxu0
    %v1617 = vadd.f32 %v1577, %v1616
    %v1618 = vpop.f32.mrf.mxu0
    %v1619 = vpop.f32.mrf.mxu0
    %v1620 = vpop.f32.mrf.mxu0
    %1621 = vdwg.mxu0
    %1622 = vmatprep.subr.bf16.mxu0 0
    %1623 = vmatpush1.bf16.msra.mxu0 %v621
    %1624 = vmatprep.subr.bf16.mxu0 0
    %1625 = vmatpush1.bf16.msra.mxu0 %v620
    %1626 = vmatprep.subr.bf16.mxu0 0
    %1627 = vmatpush1.bf16.msra.mxu0 %v619
    %1628 = vmatprep.subr.bf16.mxu0 0
    %1629 = vmatpush1.bf16.msra.mxu0 %v618
    %1630 = vmatprep.subr.bf16.mxu0 0
    %1631 = vmatpush1.bf16.msra.mxu0 %v617
    %1632 = vmatprep.subr.bf16.mxu0 0
    %1633 = vmatpush1.bf16.msra.mxu0 %v616
    %1634 = vmatprep.subr.bf16.mxu0 0
    %1635 = vmatpush1.bf16.msra.mxu0 %v615
    %1636 = vmatprep.subr.bf16.mxu0 0
    %1637 = vmatpush1.bf16.msra.mxu0 %v614
    %1638 = vmatprep.subr.bf16.mxu0 0
    %1639 = vmatpush2.bf16.msra.mxu0 %v629
    %1640 = vmatprep.subr.bf16.mxu0 0
    %1641 = vmatpush2.bf16.msra.mxu0 %v628
    %1642 = vmatprep.subr.bf16.mxu0 0
    %1643 = vmatpush2.bf16.msra.mxu0 %v627
    %1644 = vmatprep.subr.bf16.mxu0 0
    %1645 = vmatpush2.bf16.msra.mxu0 %v626
    %1646 = vmatprep.subr.bf16.mxu0 0
    %1647 = vmatpush2.bf16.msra.mxu0 %v625
    %1648 = vmatprep.subr.bf16.mxu0 0
    %1649 = vmatpush2.bf16.msra.mxu0 %v624
    %1650 = vmatprep.subr.bf16.mxu0 0
    %1651 = vmatpush2.bf16.msra.mxu0 %v623
    %1652 = vmatprep.subr.bf16.mxu0 0
    %1653 = vmatpush2.bf16.msra.mxu0 %v622
    %1654 = vmatprep.mubr.bf16.mxu0 %v1527
    %1655 = vmatmul.mubr.bf16.gmra.mxu0 %v1520
    %v1656 = vpop.f32.mrf.mxu0
    %v1657 = vadd.f32 %v1617, %v1656
    %v1658 = vpop.f32.mrf.mxu0
    %v1659 = vpop.f32.mrf.mxu0
    %v1660 = vpop.f32.mrf.mxu0
    %1661 = vdwg.mxu0
    %1662 = vmatprep.subr.bf16.mxu0 0
    %1663 = vmatpush1.bf16.msra.mxu0 %v637
    %1664 = vmatprep.subr.bf16.mxu0 0
    %1665 = vmatpush1.bf16.msra.mxu0 %v636
    %1666 = vmatprep.subr.bf16.mxu0 0
    %1667 = vmatpush1.bf16.msra.mxu0 %v635
    %1668 = vmatprep.subr.bf16.mxu0 0
    %1669 = vmatpush1.bf16.msra.mxu0 %v634
    %1670 = vmatprep.subr.bf16.mxu0 0
    %1671 = vmatpush1.bf16.msra.mxu0 %v633
    %1672 = vmatprep.subr.bf16.mxu0 0
    %1673 = vmatpush1.bf16.msra.mxu0 %v632
    %1674 = vmatprep.subr.bf16.mxu0 0
    %1675 = vmatpush1.bf16.msra.mxu0 %v631
    %1676 = vmatprep.subr.bf16.mxu0 0
    %1677 = vmatpush1.bf16.msra.mxu0 %v630
    %1678 = vmatprep.subr.bf16.mxu0 0
    %1679 = vmatpush2.bf16.msra.mxu0 %v645
    %1680 = vmatprep.subr.bf16.mxu0 0
    %1681 = vmatpush2.bf16.msra.mxu0 %v644
    %1682 = vmatprep.subr.bf16.mxu0 0
    %1683 = vmatpush2.bf16.msra.mxu0 %v643
    %1684 = vmatprep.subr.bf16.mxu0 0
    %1685 = vmatpush2.bf16.msra.mxu0 %v642
    %1686 = vmatprep.subr.bf16.mxu0 0
    %1687 = vmatpush2.bf16.msra.mxu0 %v641
    %1688 = vmatprep.subr.bf16.mxu0 0
    %1689 = vmatpush2.bf16.msra.mxu0 %v640
    %1690 = vmatprep.subr.bf16.mxu0 0
    %1691 = vmatpush2.bf16.msra.mxu0 %v639
    %1692 = vmatprep.subr.bf16.mxu0 0
    %1693 = vmatpush2.bf16.msra.mxu0 %v638
    %1694 = vmatprep.mubr.bf16.mxu0 %v1541
    %1695 = vmatmul.mubr.bf16.gmra.mxu0 %v1534
    %v1696 = vpop.f32.mrf.mxu0
    %v1697 = vadd.f32 %v1657, %v1696
    %v1698 = vpop.f32.mrf.mxu0
    %v1699 = vpop.f32.mrf.mxu0
    %v1700 = vpop.f32.mrf.mxu0
    %1701 = vdwg.mxu0
    %v1702 = vmax.f32 %v1513, %v1697
    %1703 = vset.pattern.permute.xlu0 6
    %1704 = vperm.xlu0 %1703, %v55
    %v1705 = vpop.permute.xlu0 %1704
    %vm1706 = vcmp.eq.s32.totalorder %v1705, %v185
    %v1707 = vsel %vm1706, 1, 0
    %v1708 = vcvt.s32.f32 %v1707
    %v1709 = vpack.c.bf16 %v1708, %v1708
    %1710 = vset.pattern.permute.xlu0 14
    %1711 = vperm.xlu0 %1710, %v55
    %v1712 = vpop.permute.xlu0 %1711
    %vm1713 = vcmp.eq.s32.totalorder %v1712, %v185
    %v1714 = vsel %vm1713, 1, 0
    %v1715 = vcvt.s32.f32 %v1714
    %v1716 = vpack.c.bf16 %v1715, %v1715
    %1717 = vset.pattern.permute.xlu0 22
    %1718 = vperm.xlu0 %1717, %v55
    %v1719 = vpop.permute.xlu0 %1718
    %vm1720 = vcmp.eq.s32.totalorder %v1719, %v185
    %v1721 = vsel %vm1720, 1, 0
    %v1722 = vcvt.s32.f32 %v1721
    %v1723 = vpack.c.bf16 %v1722, %v1722
    %1724 = vset.pattern.permute.xlu0 30
    %1725 = vperm.xlu0 %1724, %v55
    %v1726 = vpop.permute.xlu0 %1725
    %vm1727 = vcmp.eq.s32.totalorder %v1726, %v185
    %v1728 = vsel %vm1727, 1, 0
    %v1729 = vcvt.s32.f32 %v1728
    %v1730 = vpack.c.bf16 %v1729, %v1729
    %1731 = vmatprep.subr.bf16.mxu0 0
    %1732 = vmatpush1.bf16.msra.mxu0 %v349
    %1733 = vmatprep.subr.bf16.mxu0 0
    %1734 = vmatpush1.bf16.msra.mxu0 %v348
    %1735 = vmatprep.subr.bf16.mxu0 0
    %1736 = vmatpush1.bf16.msra.mxu0 %v347
    %1737 = vmatprep.subr.bf16.mxu0 0
    %1738 = vmatpush1.bf16.msra.mxu0 %v346
    %1739 = vmatprep.subr.bf16.mxu0 0
    %1740 = vmatpush1.bf16.msra.mxu0 %v345
    %1741 = vmatprep.subr.bf16.mxu0 0
    %1742 = vmatpush1.bf16.msra.mxu0 %v344
    %1743 = vmatprep.subr.bf16.mxu0 0
    %1744 = vmatpush1.bf16.msra.mxu0 %v343
    %1745 = vmatprep.subr.bf16.mxu0 0
    %1746 = vmatpush1.bf16.msra.mxu0 %v342
    %1747 = vmatprep.subr.bf16.mxu0 0
    %1748 = vmatpush2.bf16.msra.mxu0 %v357
    %1749 = vmatprep.subr.bf16.mxu0 0
    %1750 = vmatpush2.bf16.msra.mxu0 %v356
    %1751 = vmatprep.subr.bf16.mxu0 0
    %1752 = vmatpush2.bf16.msra.mxu0 %v355
    %1753 = vmatprep.subr.bf16.mxu0 0
    %1754 = vmatpush2.bf16.msra.mxu0 %v354
    %1755 = vmatprep.subr.bf16.mxu0 0
    %1756 = vmatpush2.bf16.msra.mxu0 %v353
    %1757 = vmatprep.subr.bf16.mxu0 0
    %1758 = vmatpush2.bf16.msra.mxu0 %v352
    %1759 = vmatprep.subr.bf16.mxu0 0
    %1760 = vmatpush2.bf16.msra.mxu0 %v351
    %1761 = vmatprep.subr.bf16.mxu0 0
    %1762 = vmatpush2.bf16.msra.mxu0 %v350
    %1763 = vmatprep.mubr.bf16.mxu0 %v1716
    %1764 = vmatmul.mubr.bf16.gmra.mxu0 %v1709
    %v1765 = vpop.f32.mrf.mxu0
    %v1766 = vadd.f32 0.0, %v1765
    %v1767 = vpop.f32.mrf.mxu0
    %v1768 = vpop.f32.mrf.mxu0
    %v1769 = vpop.f32.mrf.mxu0
    %1770 = vdwg.mxu0
    %1771 = vmatprep.subr.bf16.mxu0 0
    %1772 = vmatpush1.bf16.msra.mxu0 %v365
    %1773 = vmatprep.subr.bf16.mxu0 0
    %1774 = vmatpush1.bf16.msra.mxu0 %v364
    %1775 = vmatprep.subr.bf16.mxu0 0
    %1776 = vmatpush1.bf16.msra.mxu0 %v363
    %1777 = vmatprep.subr.bf16.mxu0 0
    %1778 = vmatpush1.bf16.msra.mxu0 %v362
    %1779 = vmatprep.subr.bf16.mxu0 0
    %1780 = vmatpush1.bf16.msra.mxu0 %v361
    %1781 = vmatprep.subr.bf16.mxu0 0
    %1782 = vmatpush1.bf16.msra.mxu0 %v360
    %1783 = vmatprep.subr.bf16.mxu0 0
    %1784 = vmatpush1.bf16.msra.mxu0 %v359
    %1785 = vmatprep.subr.bf16.mxu0 0
    %1786 = vmatpush1.bf16.msra.mxu0 %v358
    %1787 = vmatprep.subr.bf16.mxu0 0
    %1788 = vmatpush2.bf16.msra.mxu0 %v373
    %1789 = vmatprep.subr.bf16.mxu0 0
    %1790 = vmatpush2.bf16.msra.mxu0 %v372
    %1791 = vmatprep.subr.bf16.mxu0 0
    %1792 = vmatpush2.bf16.msra.mxu0 %v371
    %1793 = vmatprep.subr.bf16.mxu0 0
    %1794 = vmatpush2.bf16.msra.mxu0 %v370
    %1795 = vmatprep.subr.bf16.mxu0 0
    %1796 = vmatpush2.bf16.msra.mxu0 %v369
    %1797 = vmatprep.subr.bf16.mxu0 0
    %1798 = vmatpush2.bf16.msra.mxu0 %v368
    %1799 = vmatprep.subr.bf16.mxu0 0
    %1800 = vmatpush2.bf16.msra.mxu0 %v367
    %1801 = vmatprep.subr.bf16.mxu0 0
    %1802 = vmatpush2.bf16.msra.mxu0 %v366
    %1803 = vmatprep.mubr.bf16.mxu0 %v1730
    %1804 = vmatmul.mubr.bf16.gmra.mxu0 %v1723
    %v1805 = vpop.f32.mrf.mxu0
    %v1806 = vadd.f32 %v1766, %v1805
    %v1807 = vpop.f32.mrf.mxu0
    %v1808 = vpop.f32.mrf.mxu0
    %v1809 = vpop.f32.mrf.mxu0
    %1810 = vdwg.mxu0
    %1811 = vmatprep.subr.bf16.mxu0 0
    %1812 = vmatpush1.bf16.msra.mxu0 %v621
    %1813 = vmatprep.subr.bf16.mxu0 0
    %1814 = vmatpush1.bf16.msra.mxu0 %v620
    %1815 = vmatprep.subr.bf16.mxu0 0
    %1816 = vmatpush1.bf16.msra.mxu0 %v619
    %1817 = vmatprep.subr.bf16.mxu0 0
    %1818 = vmatpush1.bf16.msra.mxu0 %v618
    %1819 = vmatprep.subr.bf16.mxu0 0
    %1820 = vmatpush1.bf16.msra.mxu0 %v617
    %1821 = vmatprep.subr.bf16.mxu0 0
    %1822 = vmatpush1.bf16.msra.mxu0 %v616
    %1823 = vmatprep.subr.bf16.mxu0 0
    %1824 = vmatpush1.bf16.msra.mxu0 %v615
    %1825 = vmatprep.subr.bf16.mxu0 0
    %1826 = vmatpush1.bf16.msra.mxu0 %v614
    %1827 = vmatprep.subr.bf16.mxu0 0
    %1828 = vmatpush2.bf16.msra.mxu0 %v629
    %1829 = vmatprep.subr.bf16.mxu0 0
    %1830 = vmatpush2.bf16.msra.mxu0 %v628
    %1831 = vmatprep.subr.bf16.mxu0 0
    %1832 = vmatpush2.bf16.msra.mxu0 %v627
    %1833 = vmatprep.subr.bf16.mxu0 0
    %1834 = vmatpush2.bf16.msra.mxu0 %v626
    %1835 = vmatprep.subr.bf16.mxu0 0
    %1836 = vmatpush2.bf16.msra.mxu0 %v625
    %1837 = vmatprep.subr.bf16.mxu0 0
    %1838 = vmatpush2.bf16.msra.mxu0 %v624
    %1839 = vmatprep.subr.bf16.mxu0 0
    %1840 = vmatpush2.bf16.msra.mxu0 %v623
    %1841 = vmatprep.subr.bf16.mxu0 0
    %1842 = vmatpush2.bf16.msra.mxu0 %v622
    %1843 = vmatprep.mubr.bf16.mxu0 %v1716
    %1844 = vmatmul.mubr.bf16.gmra.mxu0 %v1709
    %v1845 = vpop.f32.mrf.mxu0
    %v1846 = vadd.f32 %v1806, %v1845
    %v1847 = vpop.f32.mrf.mxu0
    %v1848 = vpop.f32.mrf.mxu0
    %v1849 = vpop.f32.mrf.mxu0
    %1850 = vdwg.mxu0
    %1851 = vmatprep.subr.bf16.mxu0 0
    %1852 = vmatpush1.bf16.msra.mxu0 %v637
    %1853 = vmatprep.subr.bf16.mxu0 0
    %1854 = vmatpush1.bf16.msra.mxu0 %v636
    %1855 = vmatprep.subr.bf16.mxu0 0
    %1856 = vmatpush1.bf16.msra.mxu0 %v635
    %1857 = vmatprep.subr.bf16.mxu0 0
    %1858 = vmatpush1.bf16.msra.mxu0 %v634
    %1859 = vmatprep.subr.bf16.mxu0 0
    %1860 = vmatpush1.bf16.msra.mxu0 %v633
    %1861 = vmatprep.subr.bf16.mxu0 0
    %1862 = vmatpush1.bf16.msra.mxu0 %v632
    %1863 = vmatprep.subr.bf16.mxu0 0
    %1864 = vmatpush1.bf16.msra.mxu0 %v631
    %1865 = vmatprep.subr.bf16.mxu0 0
    %1866 = vmatpush1.bf16.msra.mxu0 %v630
    %1867 = vmatprep.subr.bf16.mxu0 0
    %1868 = vmatpush2.bf16.msra.mxu0 %v645
    %1869 = vmatprep.subr.bf16.mxu0 0
    %1870 = vmatpush2.bf16.msra.mxu0 %v644
    %1871 = vmatprep.subr.bf16.mxu0 0
    %1872 = vmatpush2.bf16.msra.mxu0 %v643
    %1873 = vmatprep.subr.bf16.mxu0 0
    %1874 = vmatpush2.bf16.msra.mxu0 %v642
    %1875 = vmatprep.subr.bf16.mxu0 0
    %1876 = vmatpush2.bf16.msra.mxu0 %v641
    %1877 = vmatprep.subr.bf16.mxu0 0
    %1878 = vmatpush2.bf16.msra.mxu0 %v640
    %1879 = vmatprep.subr.bf16.mxu0 0
    %1880 = vmatpush2.bf16.msra.mxu0 %v639
    %1881 = vmatprep.subr.bf16.mxu0 0
    %1882 = vmatpush2.bf16.msra.mxu0 %v638
    %1883 = vmatprep.mubr.bf16.mxu0 %v1730
    %1884 = vmatmul.mubr.bf16.gmra.mxu0 %v1723
    %v1885 = vpop.f32.mrf.mxu0
    %v1886 = vadd.f32 %v1846, %v1885
    %v1887 = vpop.f32.mrf.mxu0
    %v1888 = vpop.f32.mrf.mxu0
    %v1889 = vpop.f32.mrf.mxu0
    %1890 = vdwg.mxu0
    %v1891 = vmax.f32 %v1702, %v1886
    %1892 = vset.pattern.permute.xlu0 7
    %1893 = vperm.xlu0 %1892, %v55
    %v1894 = vpop.permute.xlu0 %1893
    %vm1895 = vcmp.eq.s32.totalorder %v1894, %v185
    %v1896 = vsel %vm1895, 1, 0
    %v1897 = vcvt.s32.f32 %v1896
    %v1898 = vpack.c.bf16 %v1897, %v1897
    %1899 = vset.pattern.permute.xlu0 15
    %1900 = vperm.xlu0 %1899, %v55
    %v1901 = vpop.permute.xlu0 %1900
    %vm1902 = vcmp.eq.s32.totalorder %v1901, %v185
    %v1903 = vsel %vm1902, 1, 0
    %v1904 = vcvt.s32.f32 %v1903
    %v1905 = vpack.c.bf16 %v1904, %v1904
    %1906 = vset.pattern.permute.xlu0 23
    %1907 = vperm.xlu0 %1906, %v55
    %v1908 = vpop.permute.xlu0 %1907
    %vm1909 = vcmp.eq.s32.totalorder %v1908, %v185
    %v1910 = vsel %vm1909, 1, 0
    %v1911 = vcvt.s32.f32 %v1910
    %v1912 = vpack.c.bf16 %v1911, %v1911
    %1913 = vset.pattern.permute.xlu0 31
    %1914 = vperm.xlu0 %1913, %v55
    %v1915 = vpop.permute.xlu0 %1914
    %vm1916 = vcmp.eq.s32.totalorder %v1915, %v185
    %v1917 = vsel %vm1916, 1, 0
    %v1918 = vcvt.s32.f32 %v1917
    %v1919 = vpack.c.bf16 %v1918, %v1918
    %1920 = vmatprep.subr.bf16.mxu0 0
    %1921 = vmatpush1.bf16.msra.mxu0 %v349
    %1922 = vmatprep.subr.bf16.mxu0 0
    %1923 = vmatpush1.bf16.msra.mxu0 %v348
    %1924 = vmatprep.subr.bf16.mxu0 0
    %1925 = vmatpush1.bf16.msra.mxu0 %v347
    %1926 = vmatprep.subr.bf16.mxu0 0
    %1927 = vmatpush1.bf16.msra.mxu0 %v346
    %1928 = vmatprep.subr.bf16.mxu0 0
    %1929 = vmatpush1.bf16.msra.mxu0 %v345
    %1930 = vmatprep.subr.bf16.mxu0 0
    %1931 = vmatpush1.bf16.msra.mxu0 %v344
    %1932 = vmatprep.subr.bf16.mxu0 0
    %1933 = vmatpush1.bf16.msra.mxu0 %v343
    %1934 = vmatprep.subr.bf16.mxu0 0
    %1935 = vmatpush1.bf16.msra.mxu0 %v342
    %1936 = vmatprep.subr.bf16.mxu0 0
    %1937 = vmatpush2.bf16.msra.mxu0 %v357
    %1938 = vmatprep.subr.bf16.mxu0 0
    %1939 = vmatpush2.bf16.msra.mxu0 %v356
    %1940 = vmatprep.subr.bf16.mxu0 0
    %1941 = vmatpush2.bf16.msra.mxu0 %v355
    %1942 = vmatprep.subr.bf16.mxu0 0
    %1943 = vmatpush2.bf16.msra.mxu0 %v354
    %1944 = vmatprep.subr.bf16.mxu0 0
    %1945 = vmatpush2.bf16.msra.mxu0 %v353
    %1946 = vmatprep.subr.bf16.mxu0 0
    %1947 = vmatpush2.bf16.msra.mxu0 %v352
    %1948 = vmatprep.subr.bf16.mxu0 0
    %1949 = vmatpush2.bf16.msra.mxu0 %v351
    %1950 = vmatprep.subr.bf16.mxu0 0
    %1951 = vmatpush2.bf16.msra.mxu0 %v350
    %1952 = vmatprep.mubr.bf16.mxu0 %v1905
    %1953 = vmatmul.mubr.bf16.gmra.mxu0 %v1898
    %v1954 = vpop.f32.mrf.mxu0
    %v1955 = vadd.f32 0.0, %v1954
    %v1956 = vpop.f32.mrf.mxu0
    %v1957 = vpop.f32.mrf.mxu0
    %v1958 = vpop.f32.mrf.mxu0
    %1959 = vdwg.mxu0
    %1960 = vmatprep.subr.bf16.mxu0 0
    %1961 = vmatpush1.bf16.msra.mxu0 %v365
    %1962 = vmatprep.subr.bf16.mxu0 0
    %1963 = vmatpush1.bf16.msra.mxu0 %v364
    %1964 = vmatprep.subr.bf16.mxu0 0
    %1965 = vmatpush1.bf16.msra.mxu0 %v363
    %1966 = vmatprep.subr.bf16.mxu0 0
    %1967 = vmatpush1.bf16.msra.mxu0 %v362
    %1968 = vmatprep.subr.bf16.mxu0 0
    %1969 = vmatpush1.bf16.msra.mxu0 %v361
    %1970 = vmatprep.subr.bf16.mxu0 0
    %1971 = vmatpush1.bf16.msra.mxu0 %v360
    %1972 = vmatprep.subr.bf16.mxu0 0
    %1973 = vmatpush1.bf16.msra.mxu0 %v359
    %1974 = vmatprep.subr.bf16.mxu0 0
    %1975 = vmatpush1.bf16.msra.mxu0 %v358
    %1976 = vmatprep.subr.bf16.mxu0 0
    %1977 = vmatpush2.bf16.msra.mxu0 %v373
    %1978 = vmatprep.subr.bf16.mxu0 0
    %1979 = vmatpush2.bf16.msra.mxu0 %v372
    %1980 = vmatprep.subr.bf16.mxu0 0
    %1981 = vmatpush2.bf16.msra.mxu0 %v371
    %1982 = vmatprep.subr.bf16.mxu0 0
    %1983 = vmatpush2.bf16.msra.mxu0 %v370
    %1984 = vmatprep.subr.bf16.mxu0 0
    %1985 = vmatpush2.bf16.msra.mxu0 %v369
    %1986 = vmatprep.subr.bf16.mxu0 0
    %1987 = vmatpush2.bf16.msra.mxu0 %v368
    %1988 = vmatprep.subr.bf16.mxu0 0
    %1989 = vmatpush2.bf16.msra.mxu0 %v367
    %1990 = vmatprep.subr.bf16.mxu0 0
    %1991 = vmatpush2.bf16.msra.mxu0 %v366
    %1992 = vmatprep.mubr.bf16.mxu0 %v1919
    %1993 = vmatmul.mubr.bf16.gmra.mxu0 %v1912
    %v1994 = vpop.f32.mrf.mxu0
    %v1995 = vadd.f32 %v1955, %v1994
    %v1996 = vpop.f32.mrf.mxu0
    %v1997 = vpop.f32.mrf.mxu0
    %v1998 = vpop.f32.mrf.mxu0
    %1999 = vdwg.mxu0
    %2000 = vmatprep.subr.bf16.mxu0 0
    %2001 = vmatpush1.bf16.msra.mxu0 %v621
    %2002 = vmatprep.subr.bf16.mxu0 0
    %2003 = vmatpush1.bf16.msra.mxu0 %v620
    %2004 = vmatprep.subr.bf16.mxu0 0
    %2005 = vmatpush1.bf16.msra.mxu0 %v619
    %2006 = vmatprep.subr.bf16.mxu0 0
    %2007 = vmatpush1.bf16.msra.mxu0 %v618
    %2008 = vmatprep.subr.bf16.mxu0 0
    %2009 = vmatpush1.bf16.msra.mxu0 %v617
    %2010 = vmatprep.subr.bf16.mxu0 0
    %2011 = vmatpush1.bf16.msra.mxu0 %v616
    %2012 = vmatprep.subr.bf16.mxu0 0
    %2013 = vmatpush1.bf16.msra.mxu0 %v615
    %2014 = vmatprep.subr.bf16.mxu0 0
    %2015 = vmatpush1.bf16.msra.mxu0 %v614
    %2016 = vmatprep.subr.bf16.mxu0 0
    %2017 = vmatpush2.bf16.msra.mxu0 %v629
    %2018 = vmatprep.subr.bf16.mxu0 0
    %2019 = vmatpush2.bf16.msra.mxu0 %v628
    %2020 = vmatprep.subr.bf16.mxu0 0
    %2021 = vmatpush2.bf16.msra.mxu0 %v627
    %2022 = vmatprep.subr.bf16.mxu0 0
    %2023 = vmatpush2.bf16.msra.mxu0 %v626
    %2024 = vmatprep.subr.bf16.mxu0 0
    %2025 = vmatpush2.bf16.msra.mxu0 %v625
    %2026 = vmatprep.subr.bf16.mxu0 0
    %2027 = vmatpush2.bf16.msra.mxu0 %v624
    %2028 = vmatprep.subr.bf16.mxu0 0
    %2029 = vmatpush2.bf16.msra.mxu0 %v623
    %2030 = vmatprep.subr.bf16.mxu0 0
    %2031 = vmatpush2.bf16.msra.mxu0 %v622
    %2032 = vmatprep.mubr.bf16.mxu0 %v1905
    %2033 = vmatmul.mubr.bf16.gmra.mxu0 %v1898
    %v2034 = vpop.f32.mrf.mxu0
    %v2035 = vadd.f32 %v1995, %v2034
    %v2036 = vpop.f32.mrf.mxu0
    %v2037 = vpop.f32.mrf.mxu0
    %v2038 = vpop.f32.mrf.mxu0
    %2039 = vdwg.mxu0
    %2040 = vmatprep.subr.bf16.mxu0 0
    %2041 = vmatpush1.bf16.msra.mxu0 %v637
    %2042 = vmatprep.subr.bf16.mxu0 0
    %2043 = vmatpush1.bf16.msra.mxu0 %v636
    %2044 = vmatprep.subr.bf16.mxu0 0
    %2045 = vmatpush1.bf16.msra.mxu0 %v635
    %2046 = vmatprep.subr.bf16.mxu0 0
    %2047 = vmatpush1.bf16.msra.mxu0 %v634
    %2048 = vmatprep.subr.bf16.mxu0 0
    %2049 = vmatpush1.bf16.msra.mxu0 %v633
    %2050 = vmatprep.subr.bf16.mxu0 0
    %2051 = vmatpush1.bf16.msra.mxu0 %v632
    %2052 = vmatprep.subr.bf16.mxu0 0
    %2053 = vmatpush1.bf16.msra.mxu0 %v631
    %2054 = vmatprep.subr.bf16.mxu0 0
    %2055 = vmatpush1.bf16.msra.mxu0 %v630
    %2056 = vmatprep.subr.bf16.mxu0 0
    %2057 = vmatpush2.bf16.msra.mxu0 %v645
    %2058 = vmatprep.subr.bf16.mxu0 0
    %2059 = vmatpush2.bf16.msra.mxu0 %v644
    %2060 = vmatprep.subr.bf16.mxu0 0
    %2061 = vmatpush2.bf16.msra.mxu0 %v643
    %2062 = vmatprep.subr.bf16.mxu0 0
    %2063 = vmatpush2.bf16.msra.mxu0 %v642
    %2064 = vmatprep.subr.bf16.mxu0 0
    %2065 = vmatpush2.bf16.msra.mxu0 %v641
    %2066 = vmatprep.subr.bf16.mxu0 0
    %2067 = vmatpush2.bf16.msra.mxu0 %v640
    %2068 = vmatprep.subr.bf16.mxu0 0
    %2069 = vmatpush2.bf16.msra.mxu0 %v639
    %2070 = vmatprep.subr.bf16.mxu0 0
    %2071 = vmatpush2.bf16.msra.mxu0 %v638
    %2072 = vmatprep.mubr.bf16.mxu0 %v1919
    %2073 = vmatmul.mubr.bf16.gmra.mxu0 %v1912
    %v2074 = vpop.f32.mrf.mxu0
    %v2075 = vadd.f32 %v2035, %v2074
    %v2076 = vpop.f32.mrf.mxu0
    %v2077 = vpop.f32.mrf.mxu0
    %v2078 = vpop.f32.mrf.mxu0
    %2079 = vdwg.mxu0
    %v2080 = vmax.f32 %v1891, %v2075
    %2081 = vst [vmem:[#allocation8] sm:$0xff] %v2080
    // Predicated region
    $region26: #{tpu_custom_call.1} parent=1 // pred_check
      _
    $region27: #{tpu_custom_call.1} parent=1 // pred_check_branch
      %2083 = sbr.rel (0) target = $region29
    $region28: #{tpu_custom_call.1} parent=1 // pred_region
      %s2085 = ssub.s32 128, 128
      %2086 = vsyncadd [#allocation4], %s2085
      %s2088 = sshll.u32 [#allocation8], 4
      %s2089 = int_to_ptr.vmem [resolvable:$true] %s2088
      %2091 = dma.vmem_to_hbm [thread:$0]  %s2089, 128, %s3, [#allocation4]
    $region29: #{tpu_custom_call.1} parent=1 // pred_fallthru
      _
    // Predicated region
    $region30: #{tpu_custom_call.1} parent=1 // pred_check
      _
    $region31: #{tpu_custom_call.1} parent=1 // pred_check_branch
      %2093 = sbr.rel (0) target = $region33
    $region32: #{tpu_custom_call.1} parent=1 // pred_region
      %2094 = dma.done [#allocation4], 128
    $region33: #{tpu_custom_call.1} parent=1 // pred_fallthru
      _
    %2095 = vsyncpa [#allocation3], 1
    %2096 = vsyncpa [#allocation6], 1
    %2097 = vsyncpa [#allocation4], 1

</llo_original>
